<compile_context>
chip_gen: v7x
topology: tpu7x:2x2x1
jax: 0.10.0
libtpu: 0.0.40
codegen_flags: <defaults>
</compile_context>

<pallas_src>
import jax
import jax.numpy as jnp
from jax.experimental import pallas as pl
from jax.experimental.pallas import tpu as pltpu


# --------------------------------------------------------------------------
# Kernel
# --------------------------------------------------------------------------
def _make_graph_header_kernel(Q, R):
    """Fused kernel over one (N, D) slab: obj class + bbox MLP on rows [:Q],
    rel class on rows [Q:]. Q, R are static Python ints."""
    has_obj = Q > 0
    has_rel = R > 0

    def kernel(*refs):
        refs = list(refs)
        x_ref = refs.pop(0)
        if has_obj:
            (wc_ref, bc_ref, w1_ref, b1_ref,
             w2_ref, b2_ref, w3_ref, b3_ref) = refs[:8]
            del refs[:8]
        if has_rel:
            wr_ref, br_ref = refs[:2]
            del refs[:2]
        if has_obj:
            ocls_ref, obox_ref = refs[:2]
            del refs[:2]
        if has_rel:
            (rcls_ref,) = refs[:1]

        x = x_ref[...]                      # (N, D) slab, VMEM resident

        if has_obj:
            # Cast activations to the weight dtype (no-op for f32 weights,
            # bf16 MXU path when prepare_params used bfloat16 weights).
            xo = x[:Q].astype(w1_ref.dtype)

            cls = (jnp.dot(xo, wc_ref[...],
                           preferred_element_type=jnp.float32) + bc_ref[...])
            ocls_ref[...] = cls.astype(ocls_ref.dtype)

            # bbox MLP: Linear+ReLU, Linear+ReLU, Linear, sigmoid (all in VMEM).
            h = (jnp.dot(xo, w1_ref[...],
                         preferred_element_type=jnp.float32) + b1_ref[...])
            h = jnp.maximum(h, 0.0)
            h = (jnp.dot(h.astype(w2_ref.dtype), w2_ref[...],
                         preferred_element_type=jnp.float32) + b2_ref[...])
            h = jnp.maximum(h, 0.0)
            box = (jnp.dot(h.astype(w3_ref.dtype), w3_ref[...],
                           preferred_element_type=jnp.float32) + b3_ref[...])
            obox_ref[...] = jax.nn.sigmoid(box).astype(obox_ref.dtype)

        if has_rel:
            xr = x[Q:].astype(wr_ref.dtype)
            rcls = (jnp.dot(xr, wr_ref[...],
                            preferred_element_type=jnp.float32) + br_ref[...])
            rcls_ref[...] = rcls.astype(rcls_ref.dtype)

    return kernel


# --------------------------------------------------------------------------
# VMEM budget (generation-aware)
# --------------------------------------------------------------------------
def _vmem_limit_bytes(weight_bytes, slab_bytes, out_bytes,
                      weights_single_buffered=True):
    try:
        cap = int(pltpu.get_tpu_info().vmem_capacity_bytes)
    except Exception:
        cap = 64 * 1024 * 1024          # conservative: v7x physical VMEM / TC
    w_mult = 1 if weights_single_buffered else 2
    need = w_mult * weight_bytes + 2 * (slab_bytes + out_bytes)
    need = int(1.5 * need) + (4 << 20)  # 50% headroom + 4 MiB slack
    # TODO(synk): if `need` exceeds ~0.9*cap (huge d_model and/or N), fall back
    # to a node-tile + K/N-tiled grid with VMEM accumulators instead of capping.
    return max(16 << 20, min(need, int(0.9 * cap)))


# --------------------------------------------------------------------------
# Pallas wrapper
# --------------------------------------------------------------------------
def _run_graph_header_kernel(x, prepared, Q, R, single_buffer_weights):
    G, N, D = x.shape
    dtype = x.dtype
    Co = prepared["wc"].shape[1]
    Cr = prepared["wr"].shape[1]
    has_obj = Q > 0
    has_rel = R > 0

    def wspec(shape):
        # Grid-invariant block: single VMEM buffer is enough (halves resident
        # weight VMEM, key for large d_model on v7x's 64 MiB VMEM).
        if single_buffer_weights:
            return pl.BlockSpec(shape, lambda g: (0, 0),
                                pipeline_mode=pl.Buffered(1))
        return pl.BlockSpec(shape, lambda g: (0, 0))

    inputs = [x]
    in_specs = [pl.BlockSpec((None, N, D), lambda g: (g, 0, 0))]

    names = []
    if has_obj:
        names += ["wc", "bc", "w1", "b1", "w2", "b2", "w3", "b3"]
    if has_rel:
        names += ["wr", "br"]
    for name in names:
        arr = prepared[name]
        inputs.append(arr)
        in_specs.append(wspec(arr.shape))

    out_shapes, out_specs = [], []
    if has_obj:
        out_shapes += [jax.ShapeDtypeStruct((G, Q, Co), dtype),
                       jax.ShapeDtypeStruct((G, Q, 4), dtype)]
        out_specs += [pl.BlockSpec((None, Q, Co), lambda g: (g, 0, 0)),
                      pl.BlockSpec((None, Q, 4), lambda g: (g, 0, 0))]
    if has_rel:
        out_shapes.append(jax.ShapeDtypeStruct((G, R, Cr), dtype))
        out_specs.append(pl.BlockSpec((None, R, Cr), lambda g: (g, 0, 0)))

    weight_bytes = sum(int(prepared[n].size) * prepared[n].dtype.itemsize
                       for n in names)
    slab_bytes = N * D * dtype.itemsize
    out_bytes = (Q * (Co + 4) + R * Cr) * dtype.itemsize

    outs = pl.pallas_call(
        _make_graph_header_kernel(Q, R),
        out_shape=tuple(out_shapes),
        grid_spec=pltpu.PrefetchScalarGridSpec(
            num_scalar_prefetch=0,
            grid=(G,),
            in_specs=in_specs,
            out_specs=tuple(out_specs),
        ),
        compiler_params=pltpu.CompilerParams(
            dimension_semantics=("parallel",),
            vmem_limit_bytes=_vmem_limit_bytes(
                weight_bytes, slab_bytes, out_bytes,
                weights_single_buffered=single_buffer_weights),
        ),
    )(*inputs)
    return list(outs)


def graph_header_forward(graph_features, prepared_params, num_obj_query):
    """graph_features: (num_layer, b, num_nodes, d_model) ->
       (obj_class_logits, obj_box_coords, rel_class_logits)."""
    L, B, N, D = graph_features.shape
    Q = int(num_obj_query)
    R = N - Q
    G = L * B
    dtype = graph_features.dtype
    Co = prepared_params["wc"].shape[1]
    Cr = prepared_params["wr"].shape[1]

    if G == 0 or N == 0:
        return (jnp.zeros((L, B, Q, Co), dtype),
                jnp.zeros((L, B, Q, 4), dtype),
                jnp.zeros((L, B, R, Cr), dtype))

    x = graph_features.reshape(G, N, D)   # contiguous reshape: no HBM copy

    try:
        outs = _run_graph_header_kernel(x, prepared_params, Q, R,
                                        single_buffer_weights=True)
    except Exception:
        # Fallback if BlockSpec(pipeline_mode=pl.Buffered(1)) is unsupported in
        # this jax build; identical semantics, default double-buffered weights.
        outs = _run_graph_header_kernel(x, prepared_params, Q, R,
                                        single_buffer_weights=False)

    idx = 0
    if Q > 0:
        obj_cls = outs[idx].reshape(L, B, Q, Co); idx += 1
        obj_box = outs[idx].reshape(L, B, Q, 4); idx += 1
    else:
        obj_cls = jnp.zeros((L, B, 0, Co), dtype)
        obj_box = jnp.zeros((L, B, 0, 4), dtype)
    if R > 0:
        rel_cls = outs[idx].reshape(L, B, R, Cr)
    else:
        rel_cls = jnp.zeros((L, B, 0, Cr), dtype)
    return obj_cls, obj_box, rel_cls


# --------------------------------------------------------------------------
# Parameters (nn.Linear default init) + one-time prep
# --------------------------------------------------------------------------
def _linear_init(key, n_in, n_out):
    kw, kb = jax.random.split(key)
    bound = 1.0 / (n_in ** 0.5)
    w = jax.random.uniform(kw, (n_in, n_out), jnp.float32, -bound, bound)
    b = jax.random.uniform(kb, (n_out,), jnp.float32, -bound, bound)
    return w, b


def init_graph_header_params(key, d_model, num_obj_classes, num_rel_classes):
    k_obj, k_rel, k1, k2, k3 = jax.random.split(key, 5)
    return {
        "obj_class": _linear_init(k_obj, d_model, num_obj_classes + 1),
        "rel_class": _linear_init(k_rel, d_model, num_rel_classes + 1),
        "bbox": [
            _linear_init(k1, d_model, d_model),
            _linear_init(k2, d_model, d_model),
            _linear_init(k3, d_model, 4),
        ],
    }


def prepare_params(params, weight_dtype=jnp.float32):
    """One-time prep (hoisted out of the per-call path): biases -> (1, C) f32,
    weights optionally cast to bf16 (v6e/v7x MXU-native path: halves weight DMA
    bytes and resident VMEM; accumulation stays f32 in-kernel)."""
    def prep(w, b):
        return w.astype(weight_dtype), b.reshape(1, -1).astype(jnp.float32)

    wc, bc = prep(*params["obj_class"])
    wr, br = prep(*params["rel_class"])
    (w1, b1), (w2, b2), (w3, b3) = [prep(w, b) for (w, b) in params["bbox"]]
    return {"wc": wc, "bc": bc, "wr": wr, "br": br,
            "w1": w1, "b1": b1, "w2": w2, "b2": b2, "w3": w3, "b3": b3}


# --------------------------------------------------------------------------
# Plain-JAX reference
# --------------------------------------------------------------------------
def graph_header_reference(graph_features, params, num_obj_query):
    obj = graph_features[:, :, :num_obj_query]
    rel = graph_features[:, :, num_obj_query:]
    wc, bc = params["obj_class"]
    wr, br = params["rel_class"]
    obj_cls = obj @ wc + bc
    rel_cls = rel @ wr + br
    h = obj
    n_layers = len(params["bbox"])
    for i, (w, b) in enumerate(params["bbox"]):
        h = h @ w + b
        if i < n_layers - 1:
            h = jnp.maximum(h, 0.0)
    return obj_cls, jax.nn.sigmoid(h), rel_cls


if __name__ == "__main__":
    key = jax.random.PRNGKey(0)

    num_layer, batch = 2, 2
    d_model = 32
    num_obj_query = 8
    num_rel_nodes = 8
    num_nodes = num_obj_query + num_rel_nodes
    num_obj_classes = 7
    num_rel_classes = 5

    kx, kp = jax.random.split(key)
    graph_features = jax.random.normal(
        kx, (num_layer, batch, num_nodes, d_model), jnp.float32)
    params = init_graph_header_params(kp, d_model, num_obj_classes,
                                      num_rel_classes)
    # f32 weights here so the 1e-5 reference check stays tight; pass
    # weight_dtype=jnp.bfloat16 for the v6e/v7x peak-MXU / low-VMEM path.
    prepared = prepare_params(params, weight_dtype=jnp.float32)

    obj_cls, obj_box, rel_cls = graph_header_forward(
        graph_features, prepared, num_obj_query)
    obj_cls = jax.block_until_ready(obj_cls)
    obj_box = jax.block_until_ready(obj_box)
    rel_cls = jax.block_until_ready(rel_cls)

    ref_cls, ref_box, ref_rel = graph_header_reference(
        graph_features, params, num_obj_query)

    assert obj_cls.shape == (num_layer, batch, num_obj_query,
                             num_obj_classes + 1)
    assert obj_box.shape == (num_layer, batch, num_obj_query, 4)
    assert rel_cls.shape == (num_layer, batch, num_rel_nodes,
                             num_rel_classes + 1)
    assert jnp.allclose(obj_cls, ref_cls, atol=1e-5, rtol=1e-5)
    assert jnp.allclose(obj_box, ref_box, atol=1e-5, rtol=1e-5)
    assert jnp.allclose(rel_cls, ref_rel, atol=1e-5, rtol=1e-5)

    print("KERNEL_OK")
</pallas_src>

<mosaic_0001>
module attributes {stable_mosaic.version = 11 : i64} {
  func.func @kernel(%arg0: i32, %arg1: memref<1x16x32xf32, #tpu.memory_space<vmem>>, %arg2: memref<32x8xf32, #tpu.memory_space<vmem>>, %arg3: memref<1x8xf32, #tpu.memory_space<vmem>>, %arg4: memref<32x32xf32, #tpu.memory_space<vmem>>, %arg5: memref<1x32xf32, #tpu.memory_space<vmem>>, %arg6: memref<32x32xf32, #tpu.memory_space<vmem>>, %arg7: memref<1x32xf32, #tpu.memory_space<vmem>>, %arg8: memref<32x4xf32, #tpu.memory_space<vmem>>, %arg9: memref<1x4xf32, #tpu.memory_space<vmem>>, %arg10: memref<32x6xf32, #tpu.memory_space<vmem>>, %arg11: memref<1x6xf32, #tpu.memory_space<vmem>>, %arg12: memref<1x8x8xf32, #tpu.memory_space<vmem>>, %arg13: memref<1x8x4xf32, #tpu.memory_space<vmem>>, %arg14: memref<1x8x6xf32, #tpu.memory_space<vmem>>) attributes {dimension_semantics = [#tpu.dimension_semantics<parallel>], iteration_bounds = array<i64: 4>, scalar_prefetch = 0 : i64, scratch_operands = 0 : i64, tpu.core_type = #tpu.core_type<tc>, window_params = [{transform_indices = @transform_0, window_bounds = array<i64: 1, 16, 32>}, {pipeline_mode = #tpu.pipeline_mode<synchronous>, transform_indices = @transform_1, window_bounds = array<i64: 32, 8>}, {pipeline_mode = #tpu.pipeline_mode<synchronous>, transform_indices = @transform_2, window_bounds = array<i64: 1, 8>}, {pipeline_mode = #tpu.pipeline_mode<synchronous>, transform_indices = @transform_3, window_bounds = array<i64: 32, 32>}, {pipeline_mode = #tpu.pipeline_mode<synchronous>, transform_indices = @transform_4, window_bounds = array<i64: 1, 32>}, {pipeline_mode = #tpu.pipeline_mode<synchronous>, transform_indices = @transform_5, window_bounds = array<i64: 32, 32>}, {pipeline_mode = #tpu.pipeline_mode<synchronous>, transform_indices = @transform_6, window_bounds = array<i64: 1, 32>}, {pipeline_mode = #tpu.pipeline_mode<synchronous>, transform_indices = @transform_7, window_bounds = array<i64: 32, 4>}, {pipeline_mode = #tpu.pipeline_mode<synchronous>, transform_indices = @transform_8, window_bounds = array<i64: 1, 4>}, {pipeline_mode = #tpu.pipeline_mode<synchronous>, transform_indices = @transform_9, window_bounds = array<i64: 32, 6>}, {pipeline_mode = #tpu.pipeline_mode<synchronous>, transform_indices = @transform_10, window_bounds = array<i64: 1, 6>}, {transform_indices = @transform_11, window_bounds = array<i64: 1, 8, 8>}, {transform_indices = @transform_12, window_bounds = array<i64: 1, 8, 4>}, {transform_indices = @transform_13, window_bounds = array<i64: 1, 8, 6>}]} {
    %c0 = arith.constant 0 : index
    %c0_0 = arith.constant 0 : index
    %c0_1 = arith.constant 0 : index
    %0 = vector.load %arg1[%c0, %c0_0, %c0_1] : memref<1x16x32xf32, #tpu.memory_space<vmem>>, vector<1x16x32xf32>
    %1 = vector.shape_cast %0 : vector<1x16x32xf32> to vector<16x32xf32>
    %2 = vector.extract_strided_slice %1 {offsets = [0, 0], sizes = [8, 32], strides = [1, 1]} : vector<16x32xf32> to vector<8x32xf32>
    %c0_2 = arith.constant 0 : index
    %c0_3 = arith.constant 0 : index
    %3 = vector.load %arg2[%c0_2, %c0_3] : memref<32x8xf32, #tpu.memory_space<vmem>>, vector<32x8xf32>
    %cst = arith.constant dense<0.000000e+00> : vector<8x8xf32>
    %4 = tpu.matmul %2, %3, %cst {dimension_numbers = #tpu.dot_dimension_numbers<[1], [0], [0], [1], [0, 0, 1, 1], [], []>} : vector<8x32xf32>, vector<32x8xf32>, vector<8x8xf32> -> vector<8x8xf32>
    %c0_4 = arith.constant 0 : index
    %c0_5 = arith.constant 0 : index
    %5 = vector.load %arg3[%c0_4, %c0_5] : memref<1x8xf32, #tpu.memory_space<vmem>>, vector<1x8xf32>
    %6 = vector.broadcast %5 : vector<1x8xf32> to vector<8x8xf32>
    %7 = arith.addf %4, %6 : vector<8x8xf32>
    %c0_6 = arith.constant 0 : index
    %c0_7 = arith.constant 0 : index
    %c0_8 = arith.constant 0 : index
    %8 = vector.load %arg12[%c0_6, %c0_7, %c0_8] : memref<1x8x8xf32, #tpu.memory_space<vmem>>, vector<1x8x8xf32>
    %9 = vector.shape_cast %8 : vector<1x8x8xf32> to vector<8x8xf32>
    %10 = vector.shape_cast %7 : vector<8x8xf32> to vector<1x8x8xf32>
    tpu.vector_store %arg12[%c0_6, %c0_7, %c0_8], %10 {strides = array<i32>} : memref<1x8x8xf32, #tpu.memory_space<vmem>>, vector<1x8x8xf32>,
    %c0_9 = arith.constant 0 : index
    %c0_10 = arith.constant 0 : index
    %11 = vector.load %arg4[%c0_9, %c0_10] : memref<32x32xf32, #tpu.memory_space<vmem>>, vector<32x32xf32>
    %cst_11 = arith.constant dense<0.000000e+00> : vector<8x32xf32>
    %12 = tpu.matmul %2, %11, %cst_11 {dimension_numbers = #tpu.dot_dimension_numbers<[1], [0], [0], [1], [0, 0, 1, 1], [], []>} : vector<8x32xf32>, vector<32x32xf32>, vector<8x32xf32> -> vector<8x32xf32>
    %c0_12 = arith.constant 0 : index
    %c0_13 = arith.constant 0 : index
    %13 = vector.load %arg5[%c0_12, %c0_13] : memref<1x32xf32, #tpu.memory_space<vmem>>, vector<1x32xf32>
    %14 = vector.broadcast %13 : vector<1x32xf32> to vector<8x32xf32>
    %15 = arith.addf %12, %14 : vector<8x32xf32>
    %cst_14 = arith.constant 0.000000e+00 : f32
    %16 = vector.broadcast %cst_14 : f32 to vector<8x32xf32>
    %17 = arith.maximumf %15, %16 : vector<8x32xf32>
    %c0_15 = arith.constant 0 : index
    %c0_16 = arith.constant 0 : index
    %18 = vector.load %arg6[%c0_15, %c0_16] : memref<32x32xf32, #tpu.memory_space<vmem>>, vector<32x32xf32>
    %cst_17 = arith.constant dense<0.000000e+00> : vector<8x32xf32>
    %19 = tpu.matmul %17, %18, %cst_17 {dimension_numbers = #tpu.dot_dimension_numbers<[1], [0], [0], [1], [0, 0, 1, 1], [], []>} : vector<8x32xf32>, vector<32x32xf32>, vector<8x32xf32> -> vector<8x32xf32>
    %c0_18 = arith.constant 0 : index
    %c0_19 = arith.constant 0 : index
    %20 = vector.load %arg7[%c0_18, %c0_19] : memref<1x32xf32, #tpu.memory_space<vmem>>, vector<1x32xf32>
    %21 = vector.broadcast %20 : vector<1x32xf32> to vector<8x32xf32>
    %22 = arith.addf %19, %21 : vector<8x32xf32>
    %cst_20 = arith.constant 0.000000e+00 : f32
    %23 = vector.broadcast %cst_20 : f32 to vector<8x32xf32>
    %24 = arith.maximumf %22, %23 : vector<8x32xf32>
    %c0_21 = arith.constant 0 : index
    %c0_22 = arith.constant 0 : index
    %25 = vector.load %arg8[%c0_21, %c0_22] : memref<32x4xf32, #tpu.memory_space<vmem>>, vector<32x4xf32>
    %cst_23 = arith.constant dense<0.000000e+00> : vector<8x4xf32>
    %26 = tpu.matmul %24, %25, %cst_23 {dimension_numbers = #tpu.dot_dimension_numbers<[1], [0], [0], [1], [0, 0, 1, 1], [], []>} : vector<8x32xf32>, vector<32x4xf32>, vector<8x4xf32> -> vector<8x4xf32>
    %c0_24 = arith.constant 0 : index
    %c0_25 = arith.constant 0 : index
    %27 = vector.load %arg9[%c0_24, %c0_25] : memref<1x4xf32, #tpu.memory_space<vmem>>, vector<1x4xf32>
    %28 = vector.broadcast %27 : vector<1x4xf32> to vector<8x4xf32>
    %29 = arith.addf %26, %28 : vector<8x4xf32>
    %30 = arith.negf %29 : vector<8x4xf32>
    %31 = math.exp %30 : vector<8x4xf32>
    %cst_26 = arith.constant 1.000000e+00 : f32
    %32 = vector.broadcast %cst_26 : f32 to vector<8x4xf32>
    %33 = arith.addf %32, %31 : vector<8x4xf32>
    %34 = arith.divf %32, %33 : vector<8x4xf32>
    %c0_27 = arith.constant 0 : index
    %c0_28 = arith.constant 0 : index
    %c0_29 = arith.constant 0 : index
    %35 = vector.load %arg13[%c0_27, %c0_28, %c0_29] : memref<1x8x4xf32, #tpu.memory_space<vmem>>, vector<1x8x4xf32>
    %36 = vector.shape_cast %35 : vector<1x8x4xf32> to vector<8x4xf32>
    %37 = vector.shape_cast %34 : vector<8x4xf32> to vector<1x8x4xf32>
    tpu.vector_store %arg13[%c0_27, %c0_28, %c0_29], %37 {strides = array<i32>} : memref<1x8x4xf32, #tpu.memory_space<vmem>>, vector<1x8x4xf32>,
    %38 = vector.extract_strided_slice %1 {offsets = [8, 0], sizes = [8, 32], strides = [1, 1]} : vector<16x32xf32> to vector<8x32xf32>
    %c0_30 = arith.constant 0 : index
    %c0_31 = arith.constant 0 : index
    %39 = vector.load %arg10[%c0_30, %c0_31] : memref<32x6xf32, #tpu.memory_space<vmem>>, vector<32x6xf32>
    %cst_32 = arith.constant dense<0.000000e+00> : vector<8x6xf32>
    %40 = tpu.matmul %38, %39, %cst_32 {dimension_numbers = #tpu.dot_dimension_numbers<[1], [0], [0], [1], [0, 0, 1, 1], [], []>} : vector<8x32xf32>, vector<32x6xf32>, vector<8x6xf32> -> vector<8x6xf32>
    %c0_33 = arith.constant 0 : index
    %c0_34 = arith.constant 0 : index
    %41 = vector.load %arg11[%c0_33, %c0_34] : memref<1x6xf32, #tpu.memory_space<vmem>>, vector<1x6xf32>
    %42 = vector.broadcast %41 : vector<1x6xf32> to vector<8x6xf32>
    %43 = arith.addf %40, %42 : vector<8x6xf32>
    %c0_35 = arith.constant 0 : index
    %c0_36 = arith.constant 0 : index
    %c0_37 = arith.constant 0 : index
    %44 = vector.load %arg14[%c0_35, %c0_36, %c0_37] : memref<1x8x6xf32, #tpu.memory_space<vmem>>, vector<1x8x6xf32>
    %45 = vector.shape_cast %44 : vector<1x8x6xf32> to vector<8x6xf32>
    %46 = vector.shape_cast %43 : vector<8x6xf32> to vector<1x8x6xf32>
    tpu.vector_store %arg14[%c0_35, %c0_36, %c0_37], %46 {strides = array<i32>} : memref<1x8x6xf32, #tpu.memory_space<vmem>>, vector<1x8x6xf32>,
    return
  }
  func.func @transform_0(%arg0: i32) -> (i32, i32, i32) {
    %c0_i32 = arith.constant 0 : i32
    %c0_i32_0 = arith.constant 0 : i32
    %c0_i32_1 = arith.constant 0 : i32
    return %arg0, %c0_i32, %c0_i32_0 : i32, i32, i32
  }
  func.func @transform_1(%arg0: i32) -> (i32, i32) {
    %c0_i32 = arith.constant 0 : i32
    %c0_i32_0 = arith.constant 0 : i32
    %c0_i32_1 = arith.constant 0 : i32
    return %c0_i32, %c0_i32_0 : i32, i32
  }
  func.func @transform_2(%arg0: i32) -> (i32, i32) {
    %c0_i32 = arith.constant 0 : i32
    %c0_i32_0 = arith.constant 0 : i32
    %c0_i32_1 = arith.constant 0 : i32
    return %c0_i32, %c0_i32_0 : i32, i32
  }
  func.func @transform_3(%arg0: i32) -> (i32, i32) {
    %c0_i32 = arith.constant 0 : i32
    %c0_i32_0 = arith.constant 0 : i32
    %c0_i32_1 = arith.constant 0 : i32
    return %c0_i32, %c0_i32_0 : i32, i32
  }
  func.func @transform_4(%arg0: i32) -> (i32, i32) {
    %c0_i32 = arith.constant 0 : i32
    %c0_i32_0 = arith.constant 0 : i32
    %c0_i32_1 = arith.constant 0 : i32
    return %c0_i32, %c0_i32_0 : i32, i32
  }
  func.func @transform_5(%arg0: i32) -> (i32, i32) {
    %c0_i32 = arith.constant 0 : i32
    %c0_i32_0 = arith.constant 0 : i32
    %c0_i32_1 = arith.constant 0 : i32
    return %c0_i32, %c0_i32_0 : i32, i32
  }
  func.func @transform_6(%arg0: i32) -> (i32, i32) {
    %c0_i32 = arith.constant 0 : i32
    %c0_i32_0 = arith.constant 0 : i32
    %c0_i32_1 = arith.constant 0 : i32
    return %c0_i32, %c0_i32_0 : i32, i32
  }
  func.func @transform_7(%arg0: i32) -> (i32, i32) {
    %c0_i32 = arith.constant 0 : i32
    %c0_i32_0 = arith.constant 0 : i32
    %c0_i32_1 = arith.constant 0 : i32
    return %c0_i32, %c0_i32_0 : i32, i32
  }
  func.func @transform_8(%arg0: i32) -> (i32, i32) {
    %c0_i32 = arith.constant 0 : i32
    %c0_i32_0 = arith.constant 0 : i32
    %c0_i32_1 = arith.constant 0 : i32
    return %c0_i32, %c0_i32_0 : i32, i32
  }
  func.func @transform_9(%arg0: i32) -> (i32, i32) {
    %c0_i32 = arith.constant 0 : i32
    %c0_i32_0 = arith.constant 0 : i32
    %c0_i32_1 = arith.constant 0 : i32
    return %c0_i32, %c0_i32_0 : i32, i32
  }
  func.func @transform_10(%arg0: i32) -> (i32, i32) {
    %c0_i32 = arith.constant 0 : i32
    %c0_i32_0 = arith.constant 0 : i32
    %c0_i32_1 = arith.constant 0 : i32
    return %c0_i32, %c0_i32_0 : i32, i32
  }
  func.func @transform_11(%arg0: i32) -> (i32, i32, i32) {
    %c0_i32 = arith.constant 0 : i32
    %c0_i32_0 = arith.constant 0 : i32
    %c0_i32_1 = arith.constant 0 : i32
    return %arg0, %c0_i32, %c0_i32_0 : i32, i32, i32
  }
  func.func @transform_12(%arg0: i32) -> (i32, i32, i32) {
    %c0_i32 = arith.constant 0 : i32
    %c0_i32_0 = arith.constant 0 : i32
    %c0_i32_1 = arith.constant 0 : i32
    return %arg0, %c0_i32, %c0_i32_0 : i32, i32, i32
  }
  func.func @transform_13(%arg0: i32) -> (i32, i32, i32) {
    %c0_i32 = arith.constant 0 : i32
    %c0_i32_0 = arith.constant 0 : i32
    %c0_i32_1 = arith.constant 0 : i32
    return %arg0, %c0_i32, %c0_i32_0 : i32, i32, i32
  }
}

module attributes {stable_mosaic.version = 11 : i64} {
  func.func @kernel(%arg0: i32, %arg1: memref<1x16x32xf32, #tpu.memory_space<vmem>>, %arg2: memref<32x8xf32, #tpu.memory_space<vmem>>, %arg3: memref<1x8xf32, #tpu.memory_space<vmem>>, %arg4: memref<32x32xf32, #tpu.memory_space<vmem>>, %arg5: memref<1x32xf32, #tpu.memory_space<vmem>>, %arg6: memref<32x32xf32, #tpu.memory_space<vmem>>, %arg7: memref<1x32xf32, #tpu.memory_space<vmem>>, %arg8: memref<32x4xf32, #tpu.memory_space<vmem>>, %arg9: memref<1x4xf32, #tpu.memory_space<vmem>>, %arg10: memref<32x6xf32, #tpu.memory_space<vmem>>, %arg11: memref<1x6xf32, #tpu.memory_space<vmem>>, %arg12: memref<1x8x8xf32, #tpu.memory_space<vmem>>, %arg13: memref<1x8x4xf32, #tpu.memory_space<vmem>>, %arg14: memref<1x8x6xf32, #tpu.memory_space<vmem>>) attributes {dimension_semantics = [#tpu.dimension_semantics<parallel>], iteration_bounds = array<i64: 4>, scalar_prefetch = 0 : i64, scratch_operands = 0 : i64, tpu.core_type = #tpu.core_type<tc>, window_params = [{transform_indices = @transform_0, window_bounds = array<i64: 1, 16, 32>}, {pipeline_mode = #tpu.pipeline_mode<synchronous>, transform_indices = @transform_1, window_bounds = array<i64: 32, 8>}, {pipeline_mode = #tpu.pipeline_mode<synchronous>, transform_indices = @transform_2, window_bounds = array<i64: 1, 8>}, {pipeline_mode = #tpu.pipeline_mode<synchronous>, transform_indices = @transform_3, window_bounds = array<i64: 32, 32>}, {pipeline_mode = #tpu.pipeline_mode<synchronous>, transform_indices = @transform_4, window_bounds = array<i64: 1, 32>}, {pipeline_mode = #tpu.pipeline_mode<synchronous>, transform_indices = @transform_5, window_bounds = array<i64: 32, 32>}, {pipeline_mode = #tpu.pipeline_mode<synchronous>, transform_indices = @transform_6, window_bounds = array<i64: 1, 32>}, {pipeline_mode = #tpu.pipeline_mode<synchronous>, transform_indices = @transform_7, window_bounds = array<i64: 32, 4>}, {pipeline_mode = #tpu.pipeline_mode<synchronous>, transform_indices = @transform_8, window_bounds = array<i64: 1, 4>}, {pipeline_mode = #tpu.pipeline_mode<synchronous>, transform_indices = @transform_9, window_bounds = array<i64: 32, 6>}, {pipeline_mode = #tpu.pipeline_mode<synchronous>, transform_indices = @transform_10, window_bounds = array<i64: 1, 6>}, {transform_indices = @transform_11, window_bounds = array<i64: 1, 8, 8>}, {transform_indices = @transform_12, window_bounds = array<i64: 1, 8, 4>}, {transform_indices = @transform_13, window_bounds = array<i64: 1, 8, 6>}]} {
    %c0 = arith.constant 0 : index
    %c0_0 = arith.constant 0 : index
    %c0_1 = arith.constant 0 : index
    %0 = vector.load %arg1[%c0, %c0_0, %c0_1] : memref<1x16x32xf32, #tpu.memory_space<vmem>>, vector<1x16x32xf32>
    %1 = vector.shape_cast %0 : vector<1x16x32xf32> to vector<16x32xf32>
    %2 = vector.extract_strided_slice %1 {offsets = [0, 0], sizes = [8, 32], strides = [1, 1]} : vector<16x32xf32> to vector<8x32xf32>
    %c0_2 = arith.constant 0 : index
    %c0_3 = arith.constant 0 : index
    %3 = vector.load %arg2[%c0_2, %c0_3] : memref<32x8xf32, #tpu.memory_space<vmem>>, vector<32x8xf32>
    %cst = arith.constant dense<0.000000e+00> : vector<8x8xf32>
    %4 = tpu.matmul %2, %3, %cst {dimension_numbers = #tpu.dot_dimension_numbers<[1], [0], [0], [1], [0, 0, 1, 1], [], []>} : vector<8x32xf32>, vector<32x8xf32>, vector<8x8xf32> -> vector<8x8xf32>
    %c0_4 = arith.constant 0 : index
    %c0_5 = arith.constant 0 : index
    %5 = vector.load %arg3[%c0_4, %c0_5] : memref<1x8xf32, #tpu.memory_space<vmem>>, vector<1x8xf32>
    %6 = vector.broadcast %5 : vector<1x8xf32> to vector<8x8xf32>
    %7 = arith.addf %4, %6 : vector<8x8xf32>
    %c0_6 = arith.constant 0 : index
    %c0_7 = arith.constant 0 : index
    %c0_8 = arith.constant 0 : index
    %8 = vector.load %arg12[%c0_6, %c0_7, %c0_8] : memref<1x8x8xf32, #tpu.memory_space<vmem>>, vector<1x8x8xf32>
    %9 = vector.shape_cast %8 : vector<1x8x8xf32> to vector<8x8xf32>
    %10 = vector.shape_cast %7 : vector<8x8xf32> to vector<1x8x8xf32>
    tpu.vector_store %arg12[%c0_6, %c0_7, %c0_8], %10 {strides = array<i32>} : memref<1x8x8xf32, #tpu.memory_space<vmem>>, vector<1x8x8xf32>,
    %c0_9 = arith.constant 0 : index
    %c0_10 = arith.constant 0 : index
    %11 = vector.load %arg4[%c0_9, %c0_10] : memref<32x32xf32, #tpu.memory_space<vmem>>, vector<32x32xf32>
    %cst_11 = arith.constant dense<0.000000e+00> : vector<8x32xf32>
    %12 = tpu.matmul %2, %11, %cst_11 {dimension_numbers = #tpu.dot_dimension_numbers<[1], [0], [0], [1], [0, 0, 1, 1], [], []>} : vector<8x32xf32>, vector<32x32xf32>, vector<8x32xf32> -> vector<8x32xf32>
    %c0_12 = arith.constant 0 : index
    %c0_13 = arith.constant 0 : index
    %13 = vector.load %arg5[%c0_12, %c0_13] : memref<1x32xf32, #tpu.memory_space<vmem>>, vector<1x32xf32>
    %14 = vector.broadcast %13 : vector<1x32xf32> to vector<8x32xf32>
    %15 = arith.addf %12, %14 : vector<8x32xf32>
    %cst_14 = arith.constant 0.000000e+00 : f32
    %16 = vector.broadcast %cst_14 : f32 to vector<8x32xf32>
    %17 = arith.maximumf %15, %16 : vector<8x32xf32>
    %c0_15 = arith.constant 0 : index
    %c0_16 = arith.constant 0 : index
    %18 = vector.load %arg6[%c0_15, %c0_16] : memref<32x32xf32, #tpu.memory_space<vmem>>, vector<32x32xf32>
    %cst_17 = arith.constant dense<0.000000e+00> : vector<8x32xf32>
    %19 = tpu.matmul %17, %18, %cst_17 {dimension_numbers = #tpu.dot_dimension_numbers<[1], [0], [0], [1], [0, 0, 1, 1], [], []>} : vector<8x32xf32>, vector<32x32xf32>, vector<8x32xf32> -> vector<8x32xf32>
    %c0_18 = arith.constant 0 : index
    %c0_19 = arith.constant 0 : index
    %20 = vector.load %arg7[%c0_18, %c0_19] : memref<1x32xf32, #tpu.memory_space<vmem>>, vector<1x32xf32>
    %21 = vector.broadcast %20 : vector<1x32xf32> to vector<8x32xf32>
    %22 = arith.addf %19, %21 : vector<8x32xf32>
    %cst_20 = arith.constant 0.000000e+00 : f32
    %23 = vector.broadcast %cst_20 : f32 to vector<8x32xf32>
    %24 = arith.maximumf %22, %23 : vector<8x32xf32>
    %c0_21 = arith.constant 0 : index
    %c0_22 = arith.constant 0 : index
    %25 = vector.load %arg8[%c0_21, %c0_22] : memref<32x4xf32, #tpu.memory_space<vmem>>, vector<32x4xf32>
    %cst_23 = arith.constant dense<0.000000e+00> : vector<8x4xf32>
    %26 = tpu.matmul %24, %25, %cst_23 {dimension_numbers = #tpu.dot_dimension_numbers<[1], [0], [0], [1], [0, 0, 1, 1], [], []>} : vector<8x32xf32>, vector<32x4xf32>, vector<8x4xf32> -> vector<8x4xf32>
    %c0_24 = arith.constant 0 : index
    %c0_25 = arith.constant 0 : index
    %27 = vector.load %arg9[%c0_24, %c0_25] : memref<1x4xf32, #tpu.memory_space<vmem>>, vector<1x4xf32>
    %28 = vector.broadcast %27 : vector<1x4xf32> to vector<8x4xf32>
    %29 = arith.addf %26, %28 : vector<8x4xf32>
    %30 = arith.negf %29 : vector<8x4xf32>
    %31 = math.exp %30 : vector<8x4xf32>
    %cst_26 = arith.constant 1.000000e+00 : f32
    %32 = vector.broadcast %cst_26 : f32 to vector<8x4xf32>
    %33 = arith.addf %32, %31 : vector<8x4xf32>
    %34 = arith.divf %32, %33 : vector<8x4xf32>
    %c0_27 = arith.constant 0 : index
    %c0_28 = arith.constant 0 : index
    %c0_29 = arith.constant 0 : index
    %35 = vector.load %arg13[%c0_27, %c0_28, %c0_29] : memref<1x8x4xf32, #tpu.memory_space<vmem>>, vector<1x8x4xf32>
    %36 = vector.shape_cast %35 : vector<1x8x4xf32> to vector<8x4xf32>
    %37 = vector.shape_cast %34 : vector<8x4xf32> to vector<1x8x4xf32>
    tpu.vector_store %arg13[%c0_27, %c0_28, %c0_29], %37 {strides = array<i32>} : memref<1x8x4xf32, #tpu.memory_space<vmem>>, vector<1x8x4xf32>,
    %38 = vector.extract_strided_slice %1 {offsets = [8, 0], sizes = [8, 32], strides = [1, 1]} : vector<16x32xf32> to vector<8x32xf32>
    %c0_30 = arith.constant 0 : index
    %c0_31 = arith.constant 0 : index
    %39 = vector.load %arg10[%c0_30, %c0_31] : memref<32x6xf32, #tpu.memory_space<vmem>>, vector<32x6xf32>
    %cst_32 = arith.constant dense<0.000000e+00> : vector<8x6xf32>
    %40 = tpu.matmul %38, %39, %cst_32 {dimension_numbers = #tpu.dot_dimension_numbers<[1], [0], [0], [1], [0, 0, 1, 1], [], []>} : vector<8x32xf32>, vector<32x6xf32>, vector<8x6xf32> -> vector<8x6xf32>
    %c0_33 = arith.constant 0 : index
    %c0_34 = arith.constant 0 : index
    %41 = vector.load %arg11[%c0_33, %c0_34] : memref<1x6xf32, #tpu.memory_space<vmem>>, vector<1x6xf32>
    %42 = vector.broadcast %41 : vector<1x6xf32> to vector<8x6xf32>
    %43 = arith.addf %40, %42 : vector<8x6xf32>
    %c0_35 = arith.constant 0 : index
    %c0_36 = arith.constant 0 : index
    %c0_37 = arith.constant 0 : index
    %44 = vector.load %arg14[%c0_35, %c0_36, %c0_37] : memref<1x8x6xf32, #tpu.memory_space<vmem>>, vector<1x8x6xf32>
    %45 = vector.shape_cast %44 : vector<1x8x6xf32> to vector<8x6xf32>
    %46 = vector.shape_cast %43 : vector<8x6xf32> to vector<1x8x6xf32>
    tpu.vector_store %arg14[%c0_35, %c0_36, %c0_37], %46 {strides = array<i32>} : memref<1x8x6xf32, #tpu.memory_space<vmem>>, vector<1x8x6xf32>,
    return
  }
  func.func @transform_0(%arg0: i32) -> (i32, i32, i32) {
    %c0_i32 = arith.constant 0 : i32
    %c0_i32_0 = arith.constant 0 : i32
    %c0_i32_1 = arith.constant 0 : i32
    return %arg0, %c0_i32, %c0_i32_0 : i32, i32, i32
  }
  func.func @transform_1(%arg0: i32) -> (i32, i32) {
    %c0_i32 = arith.constant 0 : i32
    %c0_i32_0 = arith.constant 0 : i32
    %c0_i32_1 = arith.constant 0 : i32
    return %c0_i32, %c0_i32_0 : i32, i32
  }
  func.func @transform_2(%arg0: i32) -> (i32, i32) {
    %c0_i32 = arith.constant 0 : i32
    %c0_i32_0 = arith.constant 0 : i32
    %c0_i32_1 = arith.constant 0 : i32
    return %c0_i32, %c0_i32_0 : i32, i32
  }
  func.func @transform_3(%arg0: i32) -> (i32, i32) {
    %c0_i32 = arith.constant 0 : i32
    %c0_i32_0 = arith.constant 0 : i32
    %c0_i32_1 = arith.constant 0 : i32
    return %c0_i32, %c0_i32_0 : i32, i32
  }
  func.func @transform_4(%arg0: i32) -> (i32, i32) {
    %c0_i32 = arith.constant 0 : i32
    %c0_i32_0 = arith.constant 0 : i32
    %c0_i32_1 = arith.constant 0 : i32
    return %c0_i32, %c0_i32_0 : i32, i32
  }
  func.func @transform_5(%arg0: i32) -> (i32, i32) {
    %c0_i32 = arith.constant 0 : i32
    %c0_i32_0 = arith.constant 0 : i32
    %c0_i32_1 = arith.constant 0 : i32
    return %c0_i32, %c0_i32_0 : i32, i32
  }
  func.func @transform_6(%arg0: i32) -> (i32, i32) {
    %c0_i32 = arith.constant 0 : i32
    %c0_i32_0 = arith.constant 0 : i32
    %c0_i32_1 = arith.constant 0 : i32
    return %c0_i32, %c0_i32_0 : i32, i32
  }
  func.func @transform_7(%arg0: i32) -> (i32, i32) {
    %c0_i32 = arith.constant 0 : i32
    %c0_i32_0 = arith.constant 0 : i32
    %c0_i32_1 = arith.constant 0 : i32
    return %c0_i32, %c0_i32_0 : i32, i32
  }
  func.func @transform_8(%arg0: i32) -> (i32, i32) {
    %c0_i32 = arith.constant 0 : i32
    %c0_i32_0 = arith.constant 0 : i32
    %c0_i32_1 = arith.constant 0 : i32
    return %c0_i32, %c0_i32_0 : i32, i32
  }
  func.func @transform_9(%arg0: i32) -> (i32, i32) {
    %c0_i32 = arith.constant 0 : i32
    %c0_i32_0 = arith.constant 0 : i32
    %c0_i32_1 = arith.constant 0 : i32
    return %c0_i32, %c0_i32_0 : i32, i32
  }
  func.func @transform_10(%arg0: i32) -> (i32, i32) {
    %c0_i32 = arith.constant 0 : i32
    %c0_i32_0 = arith.constant 0 : i32
    %c0_i32_1 = arith.constant 0 : i32
    return %c0_i32, %c0_i32_0 : i32, i32
  }
  func.func @transform_11(%arg0: i32) -> (i32, i32, i32) {
    %c0_i32 = arith.constant 0 : i32
    %c0_i32_0 = arith.constant 0 : i32
    %c0_i32_1 = arith.constant 0 : i32
    return %arg0, %c0_i32, %c0_i32_0 : i32, i32, i32
  }
  func.func @transform_12(%arg0: i32) -> (i32, i32, i32) {
    %c0_i32 = arith.constant 0 : i32
    %c0_i32_0 = arith.constant 0 : i32
    %c0_i32_1 = arith.constant 0 : i32
    return %arg0, %c0_i32, %c0_i32_0 : i32, i32, i32
  }
  func.func @transform_13(%arg0: i32) -> (i32, i32, i32) {
    %c0_i32 = arith.constant 0 : i32
    %c0_i32_0 = arith.constant 0 : i32
    %c0_i32_1 = arith.constant 0 : i32
    return %arg0, %c0_i32, %c0_i32_0 : i32, i32, i32
  }
}

</mosaic_0001>

<llo_original>
// kernel: tpu_custom_call.1
$region0: #{tpu_custom_call.1}
  #allocation0 [shape = 'u32[]', space=smem, size = 0x4, offset = 0x4, fixed_abs, tag = 'smem constant byte address 0x4 - core index']
  #allocation1 [shape = 'u32[144,128]{1,0:T(1,128)}', space=vmem, size = 0x12000, scoped, tag = 'internal scratch']
  %s0 = inlined_call_operand.vmem [shape: f32[4,16,32], index: 0, kind: input, shape index: {}]
  %s1 = inlined_call_operand.vmem [shape: f32[32,8], index: 1, kind: input, shape index: {}]
  %s2 = inlined_call_operand.vmem [shape: f32[1,8], index: 2, kind: input, shape index: {}]
  %s3 = inlined_call_operand.vmem [shape: f32[32,32], index: 3, kind: input, shape index: {}]
  %s4 = inlined_call_operand.vmem [shape: f32[1,32], index: 4, kind: input, shape index: {}]
  %s5 = inlined_call_operand.vmem [shape: f32[32,32], index: 5, kind: input, shape index: {}]
  %s6 = inlined_call_operand.hbm [shape: f32[1,32], index: 6, kind: input, shape index: {}]
  %s7 = inlined_call_operand.vmem [shape: f32[32,4], index: 7, kind: input, shape index: {}]
  %s8 = inlined_call_operand.vmem [shape: f32[1,4], index: 8, kind: input, shape index: {}]
  %s9 = inlined_call_operand.vmem [shape: f32[32,6], index: 9, kind: input, shape index: {}]
  %s10 = inlined_call_operand.vmem [shape: f32[1,6], index: 10, kind: input, shape index: {}]
  %s11 = inlined_call_operand.hbm [shape: f32[4,8,8], index: 11, kind: output, shape index: {0}]
  %s12 = inlined_call_operand.vmem [shape: f32[4,8,4], index: 12, kind: output, shape index: {1}]
  %s13 = inlined_call_operand.vmem [shape: f32[4,8,6], index: 13, kind: output, shape index: {2}]
  %14 = xla_tuple %s11, %s12, %s13
  %s15 = sld [smem:[#allocation0]]
  $region97: #{tpu_custom_call.1} parent=0
    _
  %s17 = ssub.s32 1, %s15
  %s18 = scalar_select 0, %s17, %s15
  $region1: #{tpu_custom_call.1} parent=0
    #allocation2 [shape = 'u8[512]{0}', space=vmem, size = 0x400, scoped, tag = 'input window, operand 6, single buffered']
    #allocation3 [shape = 's32[2]{0}', space=sflag, size = 0x8, scoped, tag = 'scoped memory for tpu_custom_call.1']
    #allocation4 [shape = 's32[2]{0}', space=sflag, size = 0x8, scoped, tag = 'scoped memory for tpu_custom_call.1']
    #allocation5 [shape = 'u8[8192]{0}', space=vmem, size = 0x2000, scoped, tag = 'output window, operand 0']
    %19 = vsyncpa [#allocation3], 0
    %20 = vsyncpa [#allocation4], 0
    %s21 = scalar_lea.sflag [#allocation4], 1
    %22 = vsyncpa %s21, 0
    loop: start=0, step=1, limit=6
    $region2: #{tpu_custom_call.1} parent=1 // loop_pre_header
      _
    $region3: #{tpu_custom_call.1} parent=1 // loop_header
      %s24 = sphi 0, %s28
      %p25 = scmp.ge.s32.totalorder %s24, 6
      %s34 = sphi 0, %s36
      %s37 = sphi 0, %s34
      %s38 = sphi 0, %s37
      %s54 = sphi 0, %s38
      %s58 = sphi 0, %s58
      %s60 = sphi 0, %s58
      %s61 = sphi 0, %s60
      %s75 = sphi 0, %s61
      %s79 = sphi 0, %s79
      %s81 = sphi 0, %s79
      %s82 = sphi 0, %s81
      %s96 = sphi 0, %s82
      %s100 = sphi 0, %s100
      %s102 = sphi 0, %s100
      %s103 = sphi 0, %s102
      %s117 = sphi 0, %s103
      %s121 = sphi 0, %s121
      %s123 = sphi 0, %s121
      %s124 = sphi 0, %s123
      %s138 = sphi 0, %s124
      %s142 = sphi 0, %s142
      %s144 = sphi 0, %s142
      %s145 = sphi 0, %s144
      %s159 = sphi 0, %s145
      %s163 = sphi 0, %s163
      %s165 = sphi 0, %s163
      %s166 = sphi 0, %s165
      %s180 = sphi 0, %s166
      %s184 = sphi 0, %s184
      %s186 = sphi 0, %s184
      %s187 = sphi 0, %s186
      %s201 = sphi 0, %s187
      %s205 = sphi 0, %s205
      %s207 = sphi 0, %s205
      %s208 = sphi 0, %s207
      %s222 = sphi 0, %s208
      %s226 = sphi 0, %s226
      %s228 = sphi 0, %s226
      %s229 = sphi 0, %s228
      %s243 = sphi 0, %s229
      %s247 = sphi 0, %s247
      %s249 = sphi 0, %s247
      %s250 = sphi 0, %s249
      %s264 = sphi 0, %s250
      %s270 = sphi 0, %s272
      %s273 = sphi 0, %s270
      %s274 = sphi 0, %s273
      %s290 = sphi 0, %s274
      %s296 = sphi 0, %s298
      %s299 = sphi 0, %s296
      %s300 = sphi 0, %s299
      %s316 = sphi 0, %s300
      %s322 = sphi 0, %s324
      %s325 = sphi 0, %s322
      %s326 = sphi 0, %s325
      %s342 = sphi 0, %s326
    $region4: #{tpu_custom_call.1} parent=1 // loop_header_branch
      %27 = sbr.rel (%p25) target = $region8
    $region5: #{tpu_custom_call.1} parent=1 // loop_body
      %s29 = ssub.s32 %s24, 1
      %s30 = ssub.s32 %s24, 2
      %s31 = sadd.s32 %s24, 1
      %s32 = ssub.s32 %s24, %s31
      %p33 = scmp.eq.s32.totalorder %s32, 0
      %s35 = sadd.s32 %s34, 1
      %s36 = scalar_select %p33, %s34, %s35
      %p39 = pneg %p33
      %p40 = scmp.eq.s32.totalorder %s24, 3
      %p41 = por %p39, %p40
      %p42 = scmp.ne.s32.totalorder %s34, %s37
      %p43 = scmp.eq.s32.totalorder %s24, 0
      %p44 = por %p42, %p43
      %p45 = scmp.ne.s32.totalorder %s34, %s37
      %p46 = scmp.eq.s32.totalorder %s29, 3
      %p47 = por %p45, %p46
      %p48 = scmp.ne.s32.totalorder %s37, %s38
      %p49 = scmp.eq.s32.totalorder %s29, 0
      %p50 = por %p48, %p49
      %p51 = scmp.ne.s32.totalorder %s37, %s38
      %p52 = scmp.eq.s32.totalorder %s30, 3
      %p53 = por %p51, %p52
      %p55 = scmp.ne.s32.totalorder %s38, %s54
      %p56 = scmp.eq.s32.totalorder %s30, 0
      %p57 = por %p55, %p56
      %s59 = sadd.s32 %s58, 1
      %p62 = scmp.eq.s32.totalorder %s24, 3
      %p63 = scmp.ne.s32.totalorder %s58, %s60
      %p64 = scmp.eq.s32.totalorder %s24, 0
      %p65 = por %p63, %p64
      %p66 = scmp.ne.s32.totalorder %s58, %s60
      %p67 = scmp.eq.s32.totalorder %s29, 3
      %p68 = por %p66, %p67
      %p69 = scmp.ne.s32.totalorder %s60, %s61
      %p70 = scmp.eq.s32.totalorder %s29, 0
      %p71 = por %p69, %p70
      %p72 = scmp.ne.s32.totalorder %s60, %s61
      %p73 = scmp.eq.s32.totalorder %s30, 3
      %p74 = por %p72, %p73
      %p76 = scmp.ne.s32.totalorder %s61, %s75
      %p77 = scmp.eq.s32.totalorder %s30, 0
      %p78 = por %p76, %p77
      %s80 = sadd.s32 %s79, 1
      %p83 = scmp.eq.s32.totalorder %s24, 3
      %p84 = scmp.ne.s32.totalorder %s79, %s81
      %p85 = scmp.eq.s32.totalorder %s24, 0
      %p86 = por %p84, %p85
      %p87 = scmp.ne.s32.totalorder %s79, %s81
      %p88 = scmp.eq.s32.totalorder %s29, 3
      %p89 = por %p87, %p88
      %p90 = scmp.ne.s32.totalorder %s81, %s82
      %p91 = scmp.eq.s32.totalorder %s29, 0
      %p92 = por %p90, %p91
      %p93 = scmp.ne.s32.totalorder %s81, %s82
      %p94 = scmp.eq.s32.totalorder %s30, 3
      %p95 = por %p93, %p94
      %p97 = scmp.ne.s32.totalorder %s82, %s96
      %p98 = scmp.eq.s32.totalorder %s30, 0
      %p99 = por %p97, %p98
      %s101 = sadd.s32 %s100, 1
      %p104 = scmp.eq.s32.totalorder %s24, 3
      %p105 = scmp.ne.s32.totalorder %s100, %s102
      %p106 = scmp.eq.s32.totalorder %s24, 0
      %p107 = por %p105, %p106
      %p108 = scmp.ne.s32.totalorder %s100, %s102
      %p109 = scmp.eq.s32.totalorder %s29, 3
      %p110 = por %p108, %p109
      %p111 = scmp.ne.s32.totalorder %s102, %s103
      %p112 = scmp.eq.s32.totalorder %s29, 0
      %p113 = por %p111, %p112
      %p114 = scmp.ne.s32.totalorder %s102, %s103
      %p115 = scmp.eq.s32.totalorder %s30, 3
      %p116 = por %p114, %p115
      %p118 = scmp.ne.s32.totalorder %s103, %s117
      %p119 = scmp.eq.s32.totalorder %s30, 0
      %p120 = por %p118, %p119
      %s122 = sadd.s32 %s121, 1
      %p125 = scmp.eq.s32.totalorder %s24, 3
      %p126 = scmp.ne.s32.totalorder %s121, %s123
      %p127 = scmp.eq.s32.totalorder %s24, 0
      %p128 = por %p126, %p127
      %p129 = scmp.ne.s32.totalorder %s121, %s123
      %p130 = scmp.eq.s32.totalorder %s29, 3
      %p131 = por %p129, %p130
      %p132 = scmp.ne.s32.totalorder %s123, %s124
      %p133 = scmp.eq.s32.totalorder %s29, 0
      %p134 = por %p132, %p133
      %p135 = scmp.ne.s32.totalorder %s123, %s124
      %p136 = scmp.eq.s32.totalorder %s30, 3
      %p137 = por %p135, %p136
      %p139 = scmp.ne.s32.totalorder %s124, %s138
      %p140 = scmp.eq.s32.totalorder %s30, 0
      %p141 = por %p139, %p140
      %s143 = sadd.s32 %s142, 1
      %p146 = scmp.eq.s32.totalorder %s24, 3
      %p147 = scmp.ne.s32.totalorder %s142, %s144
      %p148 = scmp.eq.s32.totalorder %s24, 0
      %p149 = por %p147, %p148
      %p150 = scmp.ne.s32.totalorder %s142, %s144
      %p151 = scmp.eq.s32.totalorder %s29, 3
      %p152 = por %p150, %p151
      %p153 = scmp.ne.s32.totalorder %s144, %s145
      %p154 = scmp.eq.s32.totalorder %s29, 0
      %p155 = por %p153, %p154
      %p156 = scmp.ne.s32.totalorder %s144, %s145
      %p157 = scmp.eq.s32.totalorder %s30, 3
      %p158 = por %p156, %p157
      %p160 = scmp.ne.s32.totalorder %s145, %s159
      %p161 = scmp.eq.s32.totalorder %s30, 0
      %p162 = por %p160, %p161
      %s164 = sadd.s32 %s163, 1
      %p167 = scmp.eq.s32.totalorder %s24, 3
      %p168 = scmp.ne.s32.totalorder %s163, %s165
      %p169 = scmp.eq.s32.totalorder %s24, 0
      %p170 = por %p168, %p169
      %p171 = scmp.ne.s32.totalorder %s163, %s165
      %p172 = scmp.eq.s32.totalorder %s29, 3
      %p173 = por %p171, %p172
      %p174 = scmp.ne.s32.totalorder %s165, %s166
      %p175 = scmp.eq.s32.totalorder %s29, 0
      %p176 = por %p174, %p175
      %p177 = scmp.ne.s32.totalorder %s165, %s166
      %p178 = scmp.eq.s32.totalorder %s30, 3
      %p179 = por %p177, %p178
      %p181 = scmp.ne.s32.totalorder %s166, %s180
      %p182 = scmp.eq.s32.totalorder %s30, 0
      %p183 = por %p181, %p182
      %s185 = sadd.s32 %s184, 1
      %p188 = scmp.eq.s32.totalorder %s24, 3
      %p189 = scmp.ne.s32.totalorder %s184, %s186
      %p190 = scmp.eq.s32.totalorder %s24, 0
      %p191 = por %p189, %p190
      %p192 = scmp.ne.s32.totalorder %s184, %s186
      %p193 = scmp.eq.s32.totalorder %s29, 3
      %p194 = por %p192, %p193
      %p195 = scmp.ne.s32.totalorder %s186, %s187
      %p196 = scmp.eq.s32.totalorder %s29, 0
      %p197 = por %p195, %p196
      %p198 = scmp.ne.s32.totalorder %s186, %s187
      %p199 = scmp.eq.s32.totalorder %s30, 3
      %p200 = por %p198, %p199
      %p202 = scmp.ne.s32.totalorder %s187, %s201
      %p203 = scmp.eq.s32.totalorder %s30, 0
      %p204 = por %p202, %p203
      %s206 = sadd.s32 %s205, 1
      %p209 = scmp.eq.s32.totalorder %s24, 3
      %p210 = scmp.ne.s32.totalorder %s205, %s207
      %p211 = scmp.eq.s32.totalorder %s24, 0
      %p212 = por %p210, %p211
      %p213 = scmp.ne.s32.totalorder %s205, %s207
      %p214 = scmp.eq.s32.totalorder %s29, 3
      %p215 = por %p213, %p214
      %p216 = scmp.ne.s32.totalorder %s207, %s208
      %p217 = scmp.eq.s32.totalorder %s29, 0
      %p218 = por %p216, %p217
      %p219 = scmp.ne.s32.totalorder %s207, %s208
      %p220 = scmp.eq.s32.totalorder %s30, 3
      %p221 = por %p219, %p220
      %p223 = scmp.ne.s32.totalorder %s208, %s222
      %p224 = scmp.eq.s32.totalorder %s30, 0
      %p225 = por %p223, %p224
      %s227 = sadd.s32 %s226, 1
      %p230 = scmp.eq.s32.totalorder %s24, 3
      %p231 = scmp.ne.s32.totalorder %s226, %s228
      %p232 = scmp.eq.s32.totalorder %s24, 0
      %p233 = por %p231, %p232
      %p234 = scmp.ne.s32.totalorder %s226, %s228
      %p235 = scmp.eq.s32.totalorder %s29, 3
      %p236 = por %p234, %p235
      %p237 = scmp.ne.s32.totalorder %s228, %s229
      %p238 = scmp.eq.s32.totalorder %s29, 0
      %p239 = por %p237, %p238
      %p240 = scmp.ne.s32.totalorder %s228, %s229
      %p241 = scmp.eq.s32.totalorder %s30, 3
      %p242 = por %p240, %p241
      %p244 = scmp.ne.s32.totalorder %s229, %s243
      %p245 = scmp.eq.s32.totalorder %s30, 0
      %p246 = por %p244, %p245
      %s248 = sadd.s32 %s247, 1
      %p251 = scmp.eq.s32.totalorder %s24, 3
      %p252 = scmp.ne.s32.totalorder %s247, %s249
      %p253 = scmp.eq.s32.totalorder %s24, 0
      %p254 = por %p252, %p253
      %p255 = scmp.ne.s32.totalorder %s247, %s249
      %p256 = scmp.eq.s32.totalorder %s29, 3
      %p257 = por %p255, %p256
      %p258 = scmp.ne.s32.totalorder %s249, %s250
      %p259 = scmp.eq.s32.totalorder %s29, 0
      %p260 = por %p258, %p259
      %p261 = scmp.ne.s32.totalorder %s249, %s250
      %p262 = scmp.eq.s32.totalorder %s30, 3
      %p263 = por %p261, %p262
      %p265 = scmp.ne.s32.totalorder %s250, %s264
      %p266 = scmp.eq.s32.totalorder %s30, 0
      %p267 = por %p265, %p266
      %s268 = ssub.s32 %s24, %s31
      %p269 = scmp.eq.s32.totalorder %s268, 0
      %s271 = sadd.s32 %s270, 1
      %s272 = scalar_select %p269, %s270, %s271
      %p275 = pneg %p269
      %p276 = scmp.eq.s32.totalorder %s24, 3
      %p277 = por %p275, %p276
      %p278 = scmp.ne.s32.totalorder %s270, %s273
      %p279 = scmp.eq.s32.totalorder %s24, 0
      %p280 = por %p278, %p279
      %p281 = scmp.ne.s32.totalorder %s270, %s273
      %p282 = scmp.eq.s32.totalorder %s29, 3
      %p283 = por %p281, %p282
      %p284 = scmp.ne.s32.totalorder %s273, %s274
      %p285 = scmp.eq.s32.totalorder %s29, 0
      %p286 = por %p284, %p285
      %p287 = scmp.ne.s32.totalorder %s273, %s274
      %p288 = scmp.eq.s32.totalorder %s30, 3
      %p289 = por %p287, %p288
      %p291 = scmp.ne.s32.totalorder %s274, %s290
      %p292 = scmp.eq.s32.totalorder %s30, 0
      %p293 = por %p291, %p292
      %s294 = ssub.s32 %s24, %s31
      %p295 = scmp.eq.s32.totalorder %s294, 0
      %s297 = sadd.s32 %s296, 1
      %s298 = scalar_select %p295, %s296, %s297
      %p301 = pneg %p295
      %p302 = scmp.eq.s32.totalorder %s24, 3
      %p303 = por %p301, %p302
      %p304 = scmp.ne.s32.totalorder %s296, %s299
      %p305 = scmp.eq.s32.totalorder %s24, 0
      %p306 = por %p304, %p305
      %p307 = scmp.ne.s32.totalorder %s296, %s299
      %p308 = scmp.eq.s32.totalorder %s29, 3
      %p309 = por %p307, %p308
      %p310 = scmp.ne.s32.totalorder %s299, %s300
      %p311 = scmp.eq.s32.totalorder %s29, 0
      %p312 = por %p310, %p311
      %p313 = scmp.ne.s32.totalorder %s299, %s300
      %p314 = scmp.eq.s32.totalorder %s30, 3
      %p315 = por %p313, %p314
      %p317 = scmp.ne.s32.totalorder %s300, %s316
      %p318 = scmp.eq.s32.totalorder %s30, 0
      %p319 = por %p317, %p318
      %s320 = ssub.s32 %s24, %s31
      %p321 = scmp.eq.s32.totalorder %s320, 0
      %s323 = sadd.s32 %s322, 1
      %s324 = scalar_select %p321, %s322, %s323
      %p327 = pneg %p321
      %p328 = scmp.eq.s32.totalorder %s24, 3
      %p329 = por %p327, %p328
      %p330 = scmp.ne.s32.totalorder %s322, %s325
      %p331 = scmp.eq.s32.totalorder %s24, 0
      %p332 = por %p330, %p331
      %p333 = scmp.ne.s32.totalorder %s322, %s325
      %p334 = scmp.eq.s32.totalorder %s29, 3
      %p335 = por %p333, %p334
      %p336 = scmp.ne.s32.totalorder %s325, %s326
      %p337 = scmp.eq.s32.totalorder %s29, 0
      %p338 = por %p336, %p337
      %p339 = scmp.ne.s32.totalorder %s325, %s326
      %p340 = scmp.eq.s32.totalorder %s30, 3
      %p341 = por %p339, %p340
      %p343 = scmp.ne.s32.totalorder %s326, %s342
      %p344 = scmp.eq.s32.totalorder %s30, 0
      %p345 = por %p343, %p344
      %p346 = scmp.le.s32.totalorder 1, %s24
      %p347 = scmp.lt.s32.totalorder %s24, 5
      %p348 = pnand %p346, %p347
      %p349 = pneg %p348
      // Predicated region
      $region9: #{tpu_custom_call.1} parent=5 // pred_check
        _
      $region10: #{tpu_custom_call.1} parent=5 // pred_check_branch
        %351 = sbr.rel (%p348) target = $region12
      $region11: #{tpu_custom_call.1} parent=5 // pred_region
        %s352 = ssub.s32 %s24, 1
        // Predicated region
        $region13: #{tpu_custom_call.1} parent=11 // pred_check
          %p353 = pneg %p71
        $region14: #{tpu_custom_call.1} parent=11 // pred_check_branch
          %355 = sbr.rel (%p353) target = $region16
        $region15: #{tpu_custom_call.1} parent=11 // pred_region
          _
        $region16: #{tpu_custom_call.1} parent=11 // pred_fallthru
          _
        // Predicated region
        $region17: #{tpu_custom_call.1} parent=11 // pred_check
          %p356 = pneg %p92
        $region18: #{tpu_custom_call.1} parent=11 // pred_check_branch
          %358 = sbr.rel (%p356) target = $region20
        $region19: #{tpu_custom_call.1} parent=11 // pred_region
          _
        $region20: #{tpu_custom_call.1} parent=11 // pred_fallthru
          _
        // Predicated region
        $region21: #{tpu_custom_call.1} parent=11 // pred_check
          %p359 = pneg %p113
        $region22: #{tpu_custom_call.1} parent=11 // pred_check_branch
          %361 = sbr.rel (%p359) target = $region24
        $region23: #{tpu_custom_call.1} parent=11 // pred_region
          _
        $region24: #{tpu_custom_call.1} parent=11 // pred_fallthru
          _
        // Predicated region
        $region25: #{tpu_custom_call.1} parent=11 // pred_check
          %p362 = pneg %p134
        $region26: #{tpu_custom_call.1} parent=11 // pred_check_branch
          %364 = sbr.rel (%p362) target = $region28
        $region27: #{tpu_custom_call.1} parent=11 // pred_region
          _
        $region28: #{tpu_custom_call.1} parent=11 // pred_fallthru
          _
        // Predicated region
        $region29: #{tpu_custom_call.1} parent=11 // pred_check
          %p365 = pneg %p155
        $region30: #{tpu_custom_call.1} parent=11 // pred_check_branch
          %367 = sbr.rel (%p365) target = $region32
        $region31: #{tpu_custom_call.1} parent=11 // pred_region
          _
        $region32: #{tpu_custom_call.1} parent=11 // pred_fallthru
          _
        // Predicated region
        $region33: #{tpu_custom_call.1} parent=11 // pred_check
          %p368 = pneg %p176
        $region34: #{tpu_custom_call.1} parent=11 // pred_check_branch
          %370 = sbr.rel (%p368) target = $region36
        $region35: #{tpu_custom_call.1} parent=11 // pred_region
          %s372 = ssub.s32 16, 16
          %373 = vsyncadd [#allocation3], %s372
          %s375 = sshll.u32 [#allocation2], 4
          %s376 = int_to_ptr.vmem [resolvable:$true] %s375
          %378 = dma.hbm_to_vmem [thread:$0]  %s6, 16, %s376, [#allocation3]
        $region36: #{tpu_custom_call.1} parent=11 // pred_fallthru
          _
        // Predicated region
        $region37: #{tpu_custom_call.1} parent=11 // pred_check
          %p379 = pneg %p197
        $region38: #{tpu_custom_call.1} parent=11 // pred_check_branch
          %381 = sbr.rel (%p379) target = $region40
        $region39: #{tpu_custom_call.1} parent=11 // pred_region
          _
        $region40: #{tpu_custom_call.1} parent=11 // pred_fallthru
          _
        // Predicated region
        $region41: #{tpu_custom_call.1} parent=11 // pred_check
          %p382 = pneg %p218
        $region42: #{tpu_custom_call.1} parent=11 // pred_check_branch
          %384 = sbr.rel (%p382) target = $region44
        $region43: #{tpu_custom_call.1} parent=11 // pred_region
          _
        $region44: #{tpu_custom_call.1} parent=11 // pred_fallthru
          _
        // Predicated region
        $region45: #{tpu_custom_call.1} parent=11 // pred_check
          %p385 = pneg %p239
        $region46: #{tpu_custom_call.1} parent=11 // pred_check_branch
          %387 = sbr.rel (%p385) target = $region48
        $region47: #{tpu_custom_call.1} parent=11 // pred_region
          _
        $region48: #{tpu_custom_call.1} parent=11 // pred_fallthru
          _
        // Predicated region
        $region49: #{tpu_custom_call.1} parent=11 // pred_check
          %p388 = pneg %p260
        $region50: #{tpu_custom_call.1} parent=11 // pred_check_branch
          %390 = sbr.rel (%p388) target = $region52
        $region51: #{tpu_custom_call.1} parent=11 // pred_region
          _
        $region52: #{tpu_custom_call.1} parent=11 // pred_fallthru
          _
      $region12: #{tpu_custom_call.1} parent=5 // pred_fallthru
        _
      %p391 = scmp.lt.s32.totalorder %s24, 4
      // Predicated region
      $region53: #{tpu_custom_call.1} parent=5 // pred_check
        %p392 = pneg %p391
      $region54: #{tpu_custom_call.1} parent=5 // pred_check_branch
        %394 = sbr.rel (%p392) target = $region56
      $region55: #{tpu_custom_call.1} parent=5 // pred_region
        // Predicated region
        $region57: #{tpu_custom_call.1} parent=55 // pred_check
          %p395 = pneg %p44
        $region58: #{tpu_custom_call.1} parent=55 // pred_check_branch
          %397 = sbr.rel (%p395) target = $region60
        $region59: #{tpu_custom_call.1} parent=55 // pred_region
          %p398 = scmp.lt.s32.totalorder %s24, 3
          %s399 = scalar_select %p398, %s24, 3
          %s400 = smul.addr %s399, 2
          %s401 = smul.addr %s400, 8
          %s402 = scalar_lea.vmem %s0, %s401
        $region60: #{tpu_custom_call.1} parent=55 // pred_fallthru
          _
      $region56: #{tpu_custom_call.1} parent=5 // pred_fallthru
        _
      %p403 = scmp.le.s32.totalorder 1, %s24
      %p404 = scmp.lt.s32.totalorder %s24, 5
      %p405 = pnand %p403, %p404
      %p406 = pneg %p405
      // Predicated region
      $region61: #{tpu_custom_call.1} parent=5 // pred_check
        _
      $region62: #{tpu_custom_call.1} parent=5 // pred_check_branch
        %408 = sbr.rel (%p405) target = $region64
      $region63: #{tpu_custom_call.1} parent=5 // pred_region
        %s409 = ssub.s32 %s24, 1
        // Predicated region
        $region65: #{tpu_custom_call.1} parent=63 // pred_check
          %p410 = pneg %p176
        $region66: #{tpu_custom_call.1} parent=63 // pred_check_branch
          %412 = sbr.rel (%p410) target = $region68
        $region67: #{tpu_custom_call.1} parent=63 // pred_region
          %413 = dma.done [#allocation3], 16
        $region68: #{tpu_custom_call.1} parent=63 // pred_fallthru
          _
        %p414 = scmp.lt.s32.totalorder %s29, 3
        %s415 = scalar_select %p414, %s29, 3
        %s416 = smul.addr %s415, 2
        %s417 = smul.addr %s416, 8
        %s418 = scalar_lea.vmem %s0, %s417
        %p419 = pneg %p50
        %p420 = pneg %p47
        %p421 = pneg %p71
        %p422 = pneg %p68
        %p423 = pneg %p92
        %p424 = pneg %p89
        %p425 = pneg %p113
        %p426 = pneg %p110
        %p427 = pneg %p134
        %p428 = pneg %p131
        %p429 = pneg %p155
        %p430 = pneg %p152
        %p431 = pneg %p176
        %p432 = pneg %p173
        %p433 = pneg %p197
        %p434 = pneg %p194
        %p435 = pneg %p218
        %p436 = pneg %p215
        %p437 = pneg %p239
        %p438 = pneg %p236
        %p439 = pneg %p260
        %p440 = pneg %p257
        %p441 = pneg %p286
        %p442 = pneg %p283
        %s443 = sand.u32 %s273, 1
        %s444 = scalar_lea.sflag [#allocation4], %s443
        %s445 = sand.u32 %s273, 1
        %s446 = smul.addr %s445, 8
        %s447 = scalar_lea.vmem [#allocation5], %s446
        %p448 = pneg %p312
        %p449 = pneg %p309
        %p450 = scmp.lt.s32.totalorder %s29, 3
        %s451 = scalar_select %p450, %s29, 3
        %s452 = smul.addr %s451, 8
        %s453 = scalar_lea.vmem %s12, %s452
        %p454 = pneg %p338
        %p455 = pneg %p335
        %p456 = scmp.lt.s32.totalorder %s29, 3
        %s457 = scalar_select %p456, %s29, 3
        %s458 = smul.addr %s457, 8
        %s459 = scalar_lea.vmem %s13, %s458
        %p460 = scmp.lt.s32.totalorder %s29, 3
        %s461 = scalar_select %p460, %s29, 3
        %s462 = smul.addr %s461, 2
        %s463 = smul.addr %s462, 8
        %s464 = scalar_lea.vmem %s0, %s463
        %p465 = scmp.lt.s32.totalorder %s29, 3
        %s466 = scalar_select %p465, %s29, 3
        %s467 = smul.addr %s466, 8
        %s468 = scalar_lea.vmem %s12, %s467
        %p469 = scmp.lt.s32.totalorder %s29, 3
        %s470 = scalar_select %p469, %s29, 3
        %s471 = smul.addr %s470, 8
        %s472 = scalar_lea.vmem %s13, %s471
        %v473 = vld [vmem:[%s464] sm:$0xff]
        %v474 = vld [vmem:[%s464 + $0x8] sm:$0xff]
        %v475 = vld [vmem:[%s1] sm:$0xff]
        %v476 = vld [vmem:[%s1 + $0x8] sm:$0xff]
        %v477 = vld [vmem:[%s1 + $0x10] sm:$0xff]
        %v478 = vld [vmem:[%s1 + $0x18] sm:$0xff]
        %v479 = vld [vmem:[%s2] sm:$0x1]
        %v481 = vlaneseq
        %v482 = vshrl.u32 %v481, 7
        %v483 = vsub.s32 0, %v482
        %v484 = vrot.slane %v479, %v483
        %vm486 = vcmask 261120
        %v488 = vsel %vm486, %v473, 0
        %490 = vmatprep.subr.mxu0 0.0
        %491 = vmatpush1.msra.mxu0 %v475
        %492 = vmatprep.subr.mxu0 0.0
        %493 = vmatpush1.msra.mxu0 %v476
        %494 = vmatprep.subr.mxu0 0.0
        %495 = vmatpush1.msra.mxu0 %v477
        %496 = vmatprep.subr.mxu0 0.0
        %497 = vmatpush1.msra.mxu0 %v478
        %498 = vmatprep.subr.mxu0 0.0
        %499 = vmatpush1.msra.mxu0 0.0
        %500 = vmatprep.subr.mxu0 0.0
        %501 = vmatpush1.msra.mxu0 0.0
        %502 = vmatprep.subr.mxu0 0.0
        %503 = vmatpush1.msra.mxu0 0.0
        %504 = vmatprep.subr.mxu0 0.0
        %505 = vmatpush1.msra.mxu0 0.0
        %506 = vmatprep.subr.mxu0 0.0
        %507 = vmatpush1.msra.mxu0 0.0
        %508 = vmatprep.subr.mxu0 0.0
        %509 = vmatpush1.msra.mxu0 0.0
        %510 = vmatprep.subr.mxu0 0.0
        %511 = vmatpush1.msra.mxu0 0.0
        %512 = vmatprep.subr.mxu0 0.0
        %513 = vmatpush1.msra.mxu0 0.0
        %514 = vmatprep.subr.mxu0 0.0
        %515 = vmatpush1.msra.mxu0 0.0
        %516 = vmatprep.subr.mxu0 0.0
        %517 = vmatpush1.msra.mxu0 0.0
        %518 = vmatprep.subr.mxu0 0.0
        %519 = vmatpush1.msra.mxu0 0.0
        %520 = vmatprep.subr.mxu0 0.0
        %521 = vmatpush1.msra.mxu0 0.0
        %522 = vmatprep.subr.mxu0 0.0
        %523 = vmatpush1.msra.mxu0 0.0
        %524 = vmatprep.subr.mxu0 0.0
        %525 = vmatpush1.msra.mxu0 0.0
        %526 = vmatprep.subr.mxu0 0.0
        %527 = vmatpush1.msra.mxu0 0.0
        %528 = vmatprep.subr.mxu0 0.0
        %529 = vmatpush1.msra.mxu0 0.0
        %530 = vmatprep.subr.mxu0 0.0
        %531 = vmatpush1.msra.mxu0 0.0
        %532 = vmatprep.subr.mxu0 0.0
        %533 = vmatpush1.msra.mxu0 0.0
        %534 = vmatprep.subr.mxu0 0.0
        %535 = vmatpush1.msra.mxu0 0.0
        %536 = vmatprep.subr.mxu0 0.0
        %537 = vmatpush1.msra.mxu0 0.0
        %538 = vmatprep.subr.mxu0 0.0
        %539 = vmatpush1.msra.mxu0 0.0
        %540 = vmatprep.subr.mxu0 0.0
        %541 = vmatpush1.msra.mxu0 0.0
        %542 = vmatprep.subr.mxu0 0.0
        %543 = vmatpush1.msra.mxu0 0.0
        %544 = vmatprep.subr.mxu0 0.0
        %545 = vmatpush1.msra.mxu0 0.0
        %546 = vmatprep.subr.mxu0 0.0
        %547 = vmatpush1.msra.mxu0 0.0
        %548 = vmatprep.subr.mxu0 0.0
        %549 = vmatpush1.msra.mxu0 0.0
        %550 = vmatprep.subr.mxu0 0.0
        %551 = vmatpush1.msra.mxu0 0.0
        %552 = vmatprep.subr.mxu0 0.0
        %553 = vmatpush1.msra.mxu0 0.0
        %554 = vmatprep.mubr.f32.mxu0 0.0
        %555 = vmatmul.mubr.f32.gmra.mrb[0].mxu0 %v488
        %v556 = vpop.f32.mrb[0].mxu0
        %v557 = vadd.f32 %v484, %v556
        %v558 = vpop.f32.mrb[0].mxu0
        %559 = vdwg.mxu0
        %vm560 = vcmask 64512
        %561 = vst.msk [vmem:[%s447] sm:$0xff] %vm560, %v557
        %v562 = vld [vmem:[%s3] sm:$0xff]
        %v563 = vld [vmem:[%s3 + $0x8] sm:$0xff]
        %v564 = vld [vmem:[%s3 + $0x10] sm:$0xff]
        %v565 = vld [vmem:[%s3 + $0x18] sm:$0xff]
        %v566 = vld [vmem:[%s4] sm:$0x1]
        %v568 = vlaneseq
        %v569 = vshrl.u32 %v568, 7
        %v570 = vsub.s32 0, %v569
        %v571 = vrot.slane %v566, %v570
        %573 = vmatprep.subr.mxu0 0.0
        %574 = vmatpush1.msra.mxu0 %v562
        %575 = vmatprep.subr.mxu0 0.0
        %576 = vmatpush1.msra.mxu0 %v563
        %577 = vmatprep.subr.mxu0 0.0
        %578 = vmatpush1.msra.mxu0 %v564
        %579 = vmatprep.subr.mxu0 0.0
        %580 = vmatpush1.msra.mxu0 %v565
        %581 = vmatprep.subr.mxu0 0.0
        %582 = vmatpush1.msra.mxu0 0.0
        %583 = vmatprep.subr.mxu0 0.0
        %584 = vmatpush1.msra.mxu0 0.0
        %585 = vmatprep.subr.mxu0 0.0
        %586 = vmatpush1.msra.mxu0 0.0
        %587 = vmatprep.subr.mxu0 0.0
        %588 = vmatpush1.msra.mxu0 0.0
        %589 = vmatprep.subr.mxu0 0.0
        %590 = vmatpush1.msra.mxu0 0.0
        %591 = vmatprep.subr.mxu0 0.0
        %592 = vmatpush1.msra.mxu0 0.0
        %593 = vmatprep.subr.mxu0 0.0
        %594 = vmatpush1.msra.mxu0 0.0
        %595 = vmatprep.subr.mxu0 0.0
        %596 = vmatpush1.msra.mxu0 0.0
        %597 = vmatprep.subr.mxu0 0.0
        %598 = vmatpush1.msra.mxu0 0.0
        %599 = vmatprep.subr.mxu0 0.0
        %600 = vmatpush1.msra.mxu0 0.0
        %601 = vmatprep.subr.mxu0 0.0
        %602 = vmatpush1.msra.mxu0 0.0
        %603 = vmatprep.subr.mxu0 0.0
        %604 = vmatpush1.msra.mxu0 0.0
        %605 = vmatprep.subr.mxu0 0.0
        %606 = vmatpush1.msra.mxu0 0.0
        %607 = vmatprep.subr.mxu0 0.0
        %608 = vmatpush1.msra.mxu0 0.0
        %609 = vmatprep.subr.mxu0 0.0
        %610 = vmatpush1.msra.mxu0 0.0
        %611 = vmatprep.subr.mxu0 0.0
        %612 = vmatpush1.msra.mxu0 0.0
        %613 = vmatprep.subr.mxu0 0.0
        %614 = vmatpush1.msra.mxu0 0.0
        %615 = vmatprep.subr.mxu0 0.0
        %616 = vmatpush1.msra.mxu0 0.0
        %617 = vmatprep.subr.mxu0 0.0
        %618 = vmatpush1.msra.mxu0 0.0
        %619 = vmatprep.subr.mxu0 0.0
        %620 = vmatpush1.msra.mxu0 0.0
        %621 = vmatprep.subr.mxu0 0.0
        %622 = vmatpush1.msra.mxu0 0.0
        %623 = vmatprep.subr.mxu0 0.0
        %624 = vmatpush1.msra.mxu0 0.0
        %625 = vmatprep.subr.mxu0 0.0
        %626 = vmatpush1.msra.mxu0 0.0
        %627 = vmatprep.subr.mxu0 0.0
        %628 = vmatpush1.msra.mxu0 0.0
        %629 = vmatprep.subr.mxu0 0.0
        %630 = vmatpush1.msra.mxu0 0.0
        %631 = vmatprep.subr.mxu0 0.0
        %632 = vmatpush1.msra.mxu0 0.0
        %633 = vmatprep.subr.mxu0 0.0
        %634 = vmatpush1.msra.mxu0 0.0
        %635 = vmatprep.subr.mxu0 0.0
        %636 = vmatpush1.msra.mxu0 0.0
        %637 = vmatprep.mubr.f32.mxu0 0.0
        %638 = vmatmul.mubr.f32.gmra.mrb[0].mxu0 %v488
        %v639 = vpop.f32.mrb[0].mxu0
        %v640 = vadd.f32 %v571, %v639
        %v641 = vpop.f32.mrb[0].mxu0
        %642 = vdwg.mxu0
        %v643 = vmax.f32 %v640, 0.0
        %v644 = vld [vmem:[%s5] sm:$0xff]
        %v645 = vld [vmem:[%s5 + $0x8] sm:$0xff]
        %v646 = vld [vmem:[%s5 + $0x10] sm:$0xff]
        %v647 = vld [vmem:[%s5 + $0x18] sm:$0xff]
        %v648 = vld [vmem:[#allocation2] sm:$0x1]
        %v650 = vlaneseq
        %v651 = vshrl.u32 %v650, 7
        %v652 = vsub.s32 0, %v651
        %v653 = vrot.slane %v648, %v652
        %v656 = vsel %vm486, %v643, 0
        %658 = vmatprep.subr.mxu0 0.0
        %659 = vmatpush1.msra.mxu0 %v644
        %660 = vmatprep.subr.mxu0 0.0
        %661 = vmatpush1.msra.mxu0 %v645
        %662 = vmatprep.subr.mxu0 0.0
        %663 = vmatpush1.msra.mxu0 %v646
        %664 = vmatprep.subr.mxu0 0.0
        %665 = vmatpush1.msra.mxu0 %v647
        %666 = vmatprep.subr.mxu0 0.0
        %667 = vmatpush1.msra.mxu0 0.0
        %668 = vmatprep.subr.mxu0 0.0
        %669 = vmatpush1.msra.mxu0 0.0
        %670 = vmatprep.subr.mxu0 0.0
        %671 = vmatpush1.msra.mxu0 0.0
        %672 = vmatprep.subr.mxu0 0.0
        %673 = vmatpush1.msra.mxu0 0.0
        %674 = vmatprep.subr.mxu0 0.0
        %675 = vmatpush1.msra.mxu0 0.0
        %676 = vmatprep.subr.mxu0 0.0
        %677 = vmatpush1.msra.mxu0 0.0
        %678 = vmatprep.subr.mxu0 0.0
        %679 = vmatpush1.msra.mxu0 0.0
        %680 = vmatprep.subr.mxu0 0.0
        %681 = vmatpush1.msra.mxu0 0.0
        %682 = vmatprep.subr.mxu0 0.0
        %683 = vmatpush1.msra.mxu0 0.0
        %684 = vmatprep.subr.mxu0 0.0
        %685 = vmatpush1.msra.mxu0 0.0
        %686 = vmatprep.subr.mxu0 0.0
        %687 = vmatpush1.msra.mxu0 0.0
        %688 = vmatprep.subr.mxu0 0.0
        %689 = vmatpush1.msra.mxu0 0.0
        %690 = vmatprep.subr.mxu0 0.0
        %691 = vmatpush1.msra.mxu0 0.0
        %692 = vmatprep.subr.mxu0 0.0
        %693 = vmatpush1.msra.mxu0 0.0
        %694 = vmatprep.subr.mxu0 0.0
        %695 = vmatpush1.msra.mxu0 0.0
        %696 = vmatprep.subr.mxu0 0.0
        %697 = vmatpush1.msra.mxu0 0.0
        %698 = vmatprep.subr.mxu0 0.0
        %699 = vmatpush1.msra.mxu0 0.0
        %700 = vmatprep.subr.mxu0 0.0
        %701 = vmatpush1.msra.mxu0 0.0
        %702 = vmatprep.subr.mxu0 0.0
        %703 = vmatpush1.msra.mxu0 0.0
        %704 = vmatprep.subr.mxu0 0.0
        %705 = vmatpush1.msra.mxu0 0.0
        %706 = vmatprep.subr.mxu0 0.0
        %707 = vmatpush1.msra.mxu0 0.0
        %708 = vmatprep.subr.mxu0 0.0
        %709 = vmatpush1.msra.mxu0 0.0
        %710 = vmatprep.subr.mxu0 0.0
        %711 = vmatpush1.msra.mxu0 0.0
        %712 = vmatprep.subr.mxu0 0.0
        %713 = vmatpush1.msra.mxu0 0.0
        %714 = vmatprep.subr.mxu0 0.0
        %715 = vmatpush1.msra.mxu0 0.0
        %716 = vmatprep.subr.mxu0 0.0
        %717 = vmatpush1.msra.mxu0 0.0
        %718 = vmatprep.subr.mxu0 0.0
        %719 = vmatpush1.msra.mxu0 0.0
        %720 = vmatprep.subr.mxu0 0.0
        %721 = vmatpush1.msra.mxu0 0.0
        %722 = vmatprep.mubr.f32.mxu0 0.0
        %723 = vmatmul.mubr.f32.gmra.mrb[0].mxu0 %v656
        %v724 = vpop.f32.mrb[0].mxu0
        %v725 = vadd.f32 %v653, %v724
        %v726 = vpop.f32.mrb[0].mxu0
        %727 = vdwg.mxu0
        %v728 = vmax.f32 %v725, 0.0
        %v729 = vld [vmem:[%s7] sm:$0xff]
        %v730 = vld [vmem:[%s7 + $0x8] sm:$0xff]
        %v731 = vld [vmem:[%s7 + $0x10] sm:$0xff]
        %v732 = vld [vmem:[%s7 + $0x18] sm:$0xff]
        %v733 = vld [vmem:[%s8] sm:$0x1]
        %v735 = vlaneseq
        %v736 = vshrl.u32 %v735, 7
        %v737 = vsub.s32 0, %v736
        %v738 = vrot.slane %v733, %v737
        %v741 = vsel %vm486, %v728, 0
        %743 = vmatprep.subr.mxu0 0.0
        %744 = vmatpush1.msra.mxu0 %v729
        %745 = vmatprep.subr.mxu0 0.0
        %746 = vmatpush1.msra.mxu0 %v730
        %747 = vmatprep.subr.mxu0 0.0
        %748 = vmatpush1.msra.mxu0 %v731
        %749 = vmatprep.subr.mxu0 0.0
        %750 = vmatpush1.msra.mxu0 %v732
        %751 = vmatprep.subr.mxu0 0.0
        %752 = vmatpush1.msra.mxu0 0.0
        %753 = vmatprep.subr.mxu0 0.0
        %754 = vmatpush1.msra.mxu0 0.0
        %755 = vmatprep.subr.mxu0 0.0
        %756 = vmatpush1.msra.mxu0 0.0
        %757 = vmatprep.subr.mxu0 0.0
        %758 = vmatpush1.msra.mxu0 0.0
        %759 = vmatprep.subr.mxu0 0.0
        %760 = vmatpush1.msra.mxu0 0.0
        %761 = vmatprep.subr.mxu0 0.0
        %762 = vmatpush1.msra.mxu0 0.0
        %763 = vmatprep.subr.mxu0 0.0
        %764 = vmatpush1.msra.mxu0 0.0
        %765 = vmatprep.subr.mxu0 0.0
        %766 = vmatpush1.msra.mxu0 0.0
        %767 = vmatprep.subr.mxu0 0.0
        %768 = vmatpush1.msra.mxu0 0.0
        %769 = vmatprep.subr.mxu0 0.0
        %770 = vmatpush1.msra.mxu0 0.0
        %771 = vmatprep.subr.mxu0 0.0
        %772 = vmatpush1.msra.mxu0 0.0
        %773 = vmatprep.subr.mxu0 0.0
        %774 = vmatpush1.msra.mxu0 0.0
        %775 = vmatprep.subr.mxu0 0.0
        %776 = vmatpush1.msra.mxu0 0.0
        %777 = vmatprep.subr.mxu0 0.0
        %778 = vmatpush1.msra.mxu0 0.0
        %779 = vmatprep.subr.mxu0 0.0
        %780 = vmatpush1.msra.mxu0 0.0
        %781 = vmatprep.subr.mxu0 0.0
        %782 = vmatpush1.msra.mxu0 0.0
        %783 = vmatprep.subr.mxu0 0.0
        %784 = vmatpush1.msra.mxu0 0.0
        %785 = vmatprep.subr.mxu0 0.0
        %786 = vmatpush1.msra.mxu0 0.0
        %787 = vmatprep.subr.mxu0 0.0
        %788 = vmatpush1.msra.mxu0 0.0
        %789 = vmatprep.subr.mxu0 0.0
        %790 = vmatpush1.msra.mxu0 0.0
        %791 = vmatprep.subr.mxu0 0.0
        %792 = vmatpush1.msra.mxu0 0.0
        %793 = vmatprep.subr.mxu0 0.0
        %794 = vmatpush1.msra.mxu0 0.0
        %795 = vmatprep.subr.mxu0 0.0
        %796 = vmatpush1.msra.mxu0 0.0
        %797 = vmatprep.subr.mxu0 0.0
        %798 = vmatpush1.msra.mxu0 0.0
        %799 = vmatprep.subr.mxu0 0.0
        %800 = vmatpush1.msra.mxu0 0.0
        %801 = vmatprep.subr.mxu0 0.0
        %802 = vmatpush1.msra.mxu0 0.0
        %803 = vmatprep.subr.mxu0 0.0
        %804 = vmatpush1.msra.mxu0 0.0
        %805 = vmatprep.subr.mxu0 0.0
        %806 = vmatpush1.msra.mxu0 0.0
        %807 = vmatprep.mubr.f32.mxu0 0.0
        %808 = vmatmul.mubr.f32.gmra.mrb[0].mxu0 %v741
        %v809 = vpop.f32.mrb[0].mxu0
        %v810 = vadd.f32 %v738, %v809
        %v811 = vpop.f32.mrb[0].mxu0
        %812 = vdwg.mxu0
        %v813 = vxor.u32 %v810, 2147483648
        %v814 = vmul.f32 %v813, 1.442695
        %v815 = vpow.pop %v814
        %v816 = vadd.f32 %v815, 1.0
        %v817 = vrcp.pop %v816
        %v818 = vmul.f32 1.0, %v817
        %vm819 = vcmask 31744
        %820 = vst.msk [vmem:[%s468] sm:$0xff] %vm819, %v818
        %v821 = vld [vmem:[%s9] sm:$0xff]
        %v822 = vld [vmem:[%s9 + $0x8] sm:$0xff]
        %v823 = vld [vmem:[%s9 + $0x10] sm:$0xff]
        %v824 = vld [vmem:[%s9 + $0x18] sm:$0xff]
        %v825 = vld [vmem:[%s10] sm:$0x1]
        %v827 = vlaneseq
        %v828 = vshrl.u32 %v827, 7
        %v829 = vsub.s32 0, %v828
        %v830 = vrot.slane %v825, %v829
        %v833 = vsel %vm486, %v474, 0
        %835 = vmatprep.subr.mxu0 0.0
        %836 = vmatpush1.msra.mxu0 %v821
        %837 = vmatprep.subr.mxu0 0.0
        %838 = vmatpush1.msra.mxu0 %v822
        %839 = vmatprep.subr.mxu0 0.0
        %840 = vmatpush1.msra.mxu0 %v823
        %841 = vmatprep.subr.mxu0 0.0
        %842 = vmatpush1.msra.mxu0 %v824
        %843 = vmatprep.subr.mxu0 0.0
        %844 = vmatpush1.msra.mxu0 0.0
        %845 = vmatprep.subr.mxu0 0.0
        %846 = vmatpush1.msra.mxu0 0.0
        %847 = vmatprep.subr.mxu0 0.0
        %848 = vmatpush1.msra.mxu0 0.0
        %849 = vmatprep.subr.mxu0 0.0
        %850 = vmatpush1.msra.mxu0 0.0
        %851 = vmatprep.subr.mxu0 0.0
        %852 = vmatpush1.msra.mxu0 0.0
        %853 = vmatprep.subr.mxu0 0.0
        %854 = vmatpush1.msra.mxu0 0.0
        %855 = vmatprep.subr.mxu0 0.0
        %856 = vmatpush1.msra.mxu0 0.0
        %857 = vmatprep.subr.mxu0 0.0
        %858 = vmatpush1.msra.mxu0 0.0
        %859 = vmatprep.subr.mxu0 0.0
        %860 = vmatpush1.msra.mxu0 0.0
        %861 = vmatprep.subr.mxu0 0.0
        %862 = vmatpush1.msra.mxu0 0.0
        %863 = vmatprep.subr.mxu0 0.0
        %864 = vmatpush1.msra.mxu0 0.0
        %865 = vmatprep.subr.mxu0 0.0
        %866 = vmatpush1.msra.mxu0 0.0
        %867 = vmatprep.subr.mxu0 0.0
        %868 = vmatpush1.msra.mxu0 0.0
        %869 = vmatprep.subr.mxu0 0.0
        %870 = vmatpush1.msra.mxu0 0.0
        %871 = vmatprep.subr.mxu0 0.0
        %872 = vmatpush1.msra.mxu0 0.0
        %873 = vmatprep.subr.mxu0 0.0
        %874 = vmatpush1.msra.mxu0 0.0
        %875 = vmatprep.subr.mxu0 0.0
        %876 = vmatpush1.msra.mxu0 0.0
        %877 = vmatprep.subr.mxu0 0.0
        %878 = vmatpush1.msra.mxu0 0.0
        %879 = vmatprep.subr.mxu0 0.0
        %880 = vmatpush1.msra.mxu0 0.0
        %881 = vmatprep.subr.mxu0 0.0
        %882 = vmatpush1.msra.mxu0 0.0
        %883 = vmatprep.subr.mxu0 0.0
        %884 = vmatpush1.msra.mxu0 0.0
        %885 = vmatprep.subr.mxu0 0.0
        %886 = vmatpush1.msra.mxu0 0.0
        %887 = vmatprep.subr.mxu0 0.0
        %888 = vmatpush1.msra.mxu0 0.0
        %889 = vmatprep.subr.mxu0 0.0
        %890 = vmatpush1.msra.mxu0 0.0
        %891 = vmatprep.subr.mxu0 0.0
        %892 = vmatpush1.msra.mxu0 0.0
        %893 = vmatprep.subr.mxu0 0.0
        %894 = vmatpush1.msra.mxu0 0.0
        %895 = vmatprep.subr.mxu0 0.0
        %896 = vmatpush1.msra.mxu0 0.0
        %897 = vmatprep.subr.mxu0 0.0
        %898 = vmatpush1.msra.mxu0 0.0
        %899 = vmatprep.mubr.f32.mxu0 0.0
        %900 = vmatmul.mubr.f32.gmra.mrb[0].mxu0 %v833
        %v901 = vpop.f32.mrb[0].mxu0
        %v902 = vadd.f32 %v830, %v901
        %v903 = vpop.f32.mrb[0].mxu0
        %904 = vdwg.mxu0
        %vm905 = vcmask 48128
        %906 = vst.msk [vmem:[%s472] sm:$0xff] %vm905, %v902
        %s907 = sand.u32 %s273, 1
        %s908 = scalar_lea.sflag [#allocation4], %s907
        %s909 = sand.u32 %s273, 1
        %s910 = smul.addr %s909, 8
        %s911 = scalar_lea.vmem [#allocation5], %s910
        %p912 = scmp.lt.s32.totalorder %s29, 3
        %s913 = scalar_select %p912, %s29, 3
        %s914 = smul.addr %s913, 8
        %s915 = scalar_lea.vmem %s12, %s914
        %p916 = scmp.lt.s32.totalorder %s29, 3
        %s917 = scalar_select %p916, %s29, 3
        %s918 = smul.addr %s917, 8
        %s919 = scalar_lea.vmem %s13, %s918
        // Predicated region
        $region69: #{tpu_custom_call.1} parent=63 // pred_check
          %p920 = pneg %p283
        $region70: #{tpu_custom_call.1} parent=63 // pred_check_branch
          %922 = sbr.rel (%p920) target = $region72
        $region71: #{tpu_custom_call.1} parent=63 // pred_region
          %s924 = ssub.s32 128, 128
          %925 = vsyncadd %s908, %s924
          %s926 = smul.addr %s29, 128
          %s927 = scalar_lea.hbm %s11, %s926
          %s929 = sshll.u32 %s911, 4
          %s930 = int_to_ptr.vmem [resolvable:$true] %s929
          %932 = dma.vmem_to_hbm [thread:$0]  %s930, 128, %s927, %s908
        $region72: #{tpu_custom_call.1} parent=63 // pred_fallthru
          _
        // Predicated region
        $region73: #{tpu_custom_call.1} parent=63 // pred_check
          %p933 = pneg %p309
        $region74: #{tpu_custom_call.1} parent=63 // pred_check_branch
          %935 = sbr.rel (%p933) target = $region76
        $region75: #{tpu_custom_call.1} parent=63 // pred_region
          _
        $region76: #{tpu_custom_call.1} parent=63 // pred_fallthru
          _
        // Predicated region
        $region77: #{tpu_custom_call.1} parent=63 // pred_check
          %p936 = pneg %p335
        $region78: #{tpu_custom_call.1} parent=63 // pred_check_branch
          %938 = sbr.rel (%p936) target = $region80
        $region79: #{tpu_custom_call.1} parent=63 // pred_region
          _
        $region80: #{tpu_custom_call.1} parent=63 // pred_fallthru
          _
      $region64: #{tpu_custom_call.1} parent=5 // pred_fallthru
        _
      %p939 = scmp.le.s32.totalorder 2, %s24
      // Predicated region
      $region81: #{tpu_custom_call.1} parent=5 // pred_check
        %p940 = pneg %p939
      $region82: #{tpu_custom_call.1} parent=5 // pred_check_branch
        %942 = sbr.rel (%p940) target = $region84
      $region83: #{tpu_custom_call.1} parent=5 // pred_region
        %s943 = ssub.s32 %s24, 2
        // Predicated region
        $region85: #{tpu_custom_call.1} parent=83 // pred_check
          %p944 = pneg %p289
        $region86: #{tpu_custom_call.1} parent=83 // pred_check_branch
          %946 = sbr.rel (%p944) target = $region88
        $region87: #{tpu_custom_call.1} parent=83 // pred_region
          %s947 = sand.u32 %s274, 1
          %s948 = scalar_lea.sflag [#allocation4], %s947
          %s949 = sand.u32 %s274, 1
          %s950 = smul.addr %s949, 8
          %s951 = scalar_lea.vmem [#allocation5], %s950
          %952 = dma.done %s948, 128
        $region88: #{tpu_custom_call.1} parent=83 // pred_fallthru
          _
        // Predicated region
        $region89: #{tpu_custom_call.1} parent=83 // pred_check
          %p953 = pneg %p315
        $region90: #{tpu_custom_call.1} parent=83 // pred_check_branch
          %955 = sbr.rel (%p953) target = $region92
        $region91: #{tpu_custom_call.1} parent=83 // pred_region
          %p956 = scmp.lt.s32.totalorder %s30, 3
          %s957 = scalar_select %p956, %s30, 3
          %s958 = smul.addr %s957, 8
          %s959 = scalar_lea.vmem %s12, %s958
        $region92: #{tpu_custom_call.1} parent=83 // pred_fallthru
          _
        // Predicated region
        $region93: #{tpu_custom_call.1} parent=83 // pred_check
          %p960 = pneg %p341
        $region94: #{tpu_custom_call.1} parent=83 // pred_check_branch
          %962 = sbr.rel (%p960) target = $region96
        $region95: #{tpu_custom_call.1} parent=83 // pred_region
          %p963 = scmp.lt.s32.totalorder %s30, 3
          %s964 = scalar_select %p963, %s30, 3
          %s965 = smul.addr %s964, 8
          %s966 = scalar_lea.vmem %s13, %s965
        $region96: #{tpu_custom_call.1} parent=83 // pred_fallthru
          _
      $region84: #{tpu_custom_call.1} parent=5 // pred_fallthru
        _
    $region6: #{tpu_custom_call.1} parent=1 // loop_footer
      %s28 = sadd.s32 1, %s24
    $region7: #{tpu_custom_call.1} parent=1 // loop_footer_branch
      %23 = sbr.rel target = $region3
    $region8: #{tpu_custom_call.1} parent=1 // loop_exit
      _
    %967 = vsyncpa [#allocation3], 1
    %s968 = scalar_lea.sflag [#allocation3], 1
    %969 = vsyncpa %s968, 1
    %970 = vsyncpa [#allocation4], 1
    %s971 = scalar_lea.sflag [#allocation4], 1
    %972 = vsyncpa %s971, 1

// kernel: tpu_custom_call.1
$region0: #{tpu_custom_call.1}
  #allocation0 [shape = 'u32[]', space=smem, size = 0x4, offset = 0x4, fixed_abs, tag = 'smem constant byte address 0x4 - core index']
  #allocation1 [shape = 'u32[144,128]{1,0:T(1,128)}', space=vmem, size = 0x12000, scoped, tag = 'internal scratch']
  %s0 = inlined_call_operand.vmem [shape: f32[4,16,32], index: 0, kind: input, shape index: {}]
  %s1 = inlined_call_operand.vmem [shape: f32[32,8], index: 1, kind: input, shape index: {}]
  %s2 = inlined_call_operand.vmem [shape: f32[1,8], index: 2, kind: input, shape index: {}]
  %s3 = inlined_call_operand.vmem [shape: f32[32,32], index: 3, kind: input, shape index: {}]
  %s4 = inlined_call_operand.vmem [shape: f32[1,32], index: 4, kind: input, shape index: {}]
  %s5 = inlined_call_operand.vmem [shape: f32[32,32], index: 5, kind: input, shape index: {}]
  %s6 = inlined_call_operand.hbm [shape: f32[1,32], index: 6, kind: input, shape index: {}]
  %s7 = inlined_call_operand.vmem [shape: f32[32,4], index: 7, kind: input, shape index: {}]
  %s8 = inlined_call_operand.vmem [shape: f32[1,4], index: 8, kind: input, shape index: {}]
  %s9 = inlined_call_operand.vmem [shape: f32[32,6], index: 9, kind: input, shape index: {}]
  %s10 = inlined_call_operand.vmem [shape: f32[1,6], index: 10, kind: input, shape index: {}]
  %s11 = inlined_call_operand.hbm [shape: f32[4,8,8], index: 11, kind: output, shape index: {0}]
  %s12 = inlined_call_operand.vmem [shape: f32[4,8,4], index: 12, kind: output, shape index: {1}]
  %s13 = inlined_call_operand.vmem [shape: f32[4,8,6], index: 13, kind: output, shape index: {2}]
  %14 = xla_tuple %s11, %s12, %s13
  %s15 = sld [smem:[#allocation0]]
  $region97: #{tpu_custom_call.1} parent=0
    _
  %s17 = ssub.s32 1, %s15
  %s18 = scalar_select 0, %s17, %s15
  $region1: #{tpu_custom_call.1} parent=0
    #allocation2 [shape = 'u8[512]{0}', space=vmem, size = 0x400, scoped, tag = 'input window, operand 6, single buffered']
    #allocation3 [shape = 's32[2]{0}', space=sflag, size = 0x8, scoped, tag = 'scoped memory for tpu_custom_call.1']
    #allocation4 [shape = 's32[2]{0}', space=sflag, size = 0x8, scoped, tag = 'scoped memory for tpu_custom_call.1']
    #allocation5 [shape = 'u8[8192]{0}', space=vmem, size = 0x2000, scoped, tag = 'output window, operand 0']
    %19 = vsyncpa [#allocation3], 0
    %20 = vsyncpa [#allocation4], 0
    %s21 = scalar_lea.sflag [#allocation4], 1
    %22 = vsyncpa %s21, 0
    loop: start=0, step=1, limit=6
    $region2: #{tpu_custom_call.1} parent=1 // loop_pre_header
      _
    $region3: #{tpu_custom_call.1} parent=1 // loop_header
      %s24 = sphi 0, %s28
      %p25 = scmp.ge.s32.totalorder %s24, 6
      %s34 = sphi 0, %s36
      %s37 = sphi 0, %s34
      %s38 = sphi 0, %s37
      %s54 = sphi 0, %s38
      %s58 = sphi 0, %s58
      %s60 = sphi 0, %s58
      %s61 = sphi 0, %s60
      %s75 = sphi 0, %s61
      %s79 = sphi 0, %s79
      %s81 = sphi 0, %s79
      %s82 = sphi 0, %s81
      %s96 = sphi 0, %s82
      %s100 = sphi 0, %s100
      %s102 = sphi 0, %s100
      %s103 = sphi 0, %s102
      %s117 = sphi 0, %s103
      %s121 = sphi 0, %s121
      %s123 = sphi 0, %s121
      %s124 = sphi 0, %s123
      %s138 = sphi 0, %s124
      %s142 = sphi 0, %s142
      %s144 = sphi 0, %s142
      %s145 = sphi 0, %s144
      %s159 = sphi 0, %s145
      %s163 = sphi 0, %s163
      %s165 = sphi 0, %s163
      %s166 = sphi 0, %s165
      %s180 = sphi 0, %s166
      %s184 = sphi 0, %s184
      %s186 = sphi 0, %s184
      %s187 = sphi 0, %s186
      %s201 = sphi 0, %s187
      %s205 = sphi 0, %s205
      %s207 = sphi 0, %s205
      %s208 = sphi 0, %s207
      %s222 = sphi 0, %s208
      %s226 = sphi 0, %s226
      %s228 = sphi 0, %s226
      %s229 = sphi 0, %s228
      %s243 = sphi 0, %s229
      %s247 = sphi 0, %s247
      %s249 = sphi 0, %s247
      %s250 = sphi 0, %s249
      %s264 = sphi 0, %s250
      %s270 = sphi 0, %s272
      %s273 = sphi 0, %s270
      %s274 = sphi 0, %s273
      %s290 = sphi 0, %s274
      %s296 = sphi 0, %s298
      %s299 = sphi 0, %s296
      %s300 = sphi 0, %s299
      %s316 = sphi 0, %s300
      %s322 = sphi 0, %s324
      %s325 = sphi 0, %s322
      %s326 = sphi 0, %s325
      %s342 = sphi 0, %s326
    $region4: #{tpu_custom_call.1} parent=1 // loop_header_branch
      %27 = sbr.rel (%p25) target = $region8
    $region5: #{tpu_custom_call.1} parent=1 // loop_body
      %s29 = ssub.s32 %s24, 1
      %s30 = ssub.s32 %s24, 2
      %s31 = sadd.s32 %s24, 1
      %s32 = ssub.s32 %s24, %s31
      %p33 = scmp.eq.s32.totalorder %s32, 0
      %s35 = sadd.s32 %s34, 1
      %s36 = scalar_select %p33, %s34, %s35
      %p39 = pneg %p33
      %p40 = scmp.eq.s32.totalorder %s24, 3
      %p41 = por %p39, %p40
      %p42 = scmp.ne.s32.totalorder %s34, %s37
      %p43 = scmp.eq.s32.totalorder %s24, 0
      %p44 = por %p42, %p43
      %p45 = scmp.ne.s32.totalorder %s34, %s37
      %p46 = scmp.eq.s32.totalorder %s29, 3
      %p47 = por %p45, %p46
      %p48 = scmp.ne.s32.totalorder %s37, %s38
      %p49 = scmp.eq.s32.totalorder %s29, 0
      %p50 = por %p48, %p49
      %p51 = scmp.ne.s32.totalorder %s37, %s38
      %p52 = scmp.eq.s32.totalorder %s30, 3
      %p53 = por %p51, %p52
      %p55 = scmp.ne.s32.totalorder %s38, %s54
      %p56 = scmp.eq.s32.totalorder %s30, 0
      %p57 = por %p55, %p56
      %s59 = sadd.s32 %s58, 1
      %p62 = scmp.eq.s32.totalorder %s24, 3
      %p63 = scmp.ne.s32.totalorder %s58, %s60
      %p64 = scmp.eq.s32.totalorder %s24, 0
      %p65 = por %p63, %p64
      %p66 = scmp.ne.s32.totalorder %s58, %s60
      %p67 = scmp.eq.s32.totalorder %s29, 3
      %p68 = por %p66, %p67
      %p69 = scmp.ne.s32.totalorder %s60, %s61
      %p70 = scmp.eq.s32.totalorder %s29, 0
      %p71 = por %p69, %p70
      %p72 = scmp.ne.s32.totalorder %s60, %s61
      %p73 = scmp.eq.s32.totalorder %s30, 3
      %p74 = por %p72, %p73
      %p76 = scmp.ne.s32.totalorder %s61, %s75
      %p77 = scmp.eq.s32.totalorder %s30, 0
      %p78 = por %p76, %p77
      %s80 = sadd.s32 %s79, 1
      %p83 = scmp.eq.s32.totalorder %s24, 3
      %p84 = scmp.ne.s32.totalorder %s79, %s81
      %p85 = scmp.eq.s32.totalorder %s24, 0
      %p86 = por %p84, %p85
      %p87 = scmp.ne.s32.totalorder %s79, %s81
      %p88 = scmp.eq.s32.totalorder %s29, 3
      %p89 = por %p87, %p88
      %p90 = scmp.ne.s32.totalorder %s81, %s82
      %p91 = scmp.eq.s32.totalorder %s29, 0
      %p92 = por %p90, %p91
      %p93 = scmp.ne.s32.totalorder %s81, %s82
      %p94 = scmp.eq.s32.totalorder %s30, 3
      %p95 = por %p93, %p94
      %p97 = scmp.ne.s32.totalorder %s82, %s96
      %p98 = scmp.eq.s32.totalorder %s30, 0
      %p99 = por %p97, %p98
      %s101 = sadd.s32 %s100, 1
      %p104 = scmp.eq.s32.totalorder %s24, 3
      %p105 = scmp.ne.s32.totalorder %s100, %s102
      %p106 = scmp.eq.s32.totalorder %s24, 0
      %p107 = por %p105, %p106
      %p108 = scmp.ne.s32.totalorder %s100, %s102
      %p109 = scmp.eq.s32.totalorder %s29, 3
      %p110 = por %p108, %p109
      %p111 = scmp.ne.s32.totalorder %s102, %s103
      %p112 = scmp.eq.s32.totalorder %s29, 0
      %p113 = por %p111, %p112
      %p114 = scmp.ne.s32.totalorder %s102, %s103
      %p115 = scmp.eq.s32.totalorder %s30, 3
      %p116 = por %p114, %p115
      %p118 = scmp.ne.s32.totalorder %s103, %s117
      %p119 = scmp.eq.s32.totalorder %s30, 0
      %p120 = por %p118, %p119
      %s122 = sadd.s32 %s121, 1
      %p125 = scmp.eq.s32.totalorder %s24, 3
      %p126 = scmp.ne.s32.totalorder %s121, %s123
      %p127 = scmp.eq.s32.totalorder %s24, 0
      %p128 = por %p126, %p127
      %p129 = scmp.ne.s32.totalorder %s121, %s123
      %p130 = scmp.eq.s32.totalorder %s29, 3
      %p131 = por %p129, %p130
      %p132 = scmp.ne.s32.totalorder %s123, %s124
      %p133 = scmp.eq.s32.totalorder %s29, 0
      %p134 = por %p132, %p133
      %p135 = scmp.ne.s32.totalorder %s123, %s124
      %p136 = scmp.eq.s32.totalorder %s30, 3
      %p137 = por %p135, %p136
      %p139 = scmp.ne.s32.totalorder %s124, %s138
      %p140 = scmp.eq.s32.totalorder %s30, 0
      %p141 = por %p139, %p140
      %s143 = sadd.s32 %s142, 1
      %p146 = scmp.eq.s32.totalorder %s24, 3
      %p147 = scmp.ne.s32.totalorder %s142, %s144
      %p148 = scmp.eq.s32.totalorder %s24, 0
      %p149 = por %p147, %p148
      %p150 = scmp.ne.s32.totalorder %s142, %s144
      %p151 = scmp.eq.s32.totalorder %s29, 3
      %p152 = por %p150, %p151
      %p153 = scmp.ne.s32.totalorder %s144, %s145
      %p154 = scmp.eq.s32.totalorder %s29, 0
      %p155 = por %p153, %p154
      %p156 = scmp.ne.s32.totalorder %s144, %s145
      %p157 = scmp.eq.s32.totalorder %s30, 3
      %p158 = por %p156, %p157
      %p160 = scmp.ne.s32.totalorder %s145, %s159
      %p161 = scmp.eq.s32.totalorder %s30, 0
      %p162 = por %p160, %p161
      %s164 = sadd.s32 %s163, 1
      %p167 = scmp.eq.s32.totalorder %s24, 3
      %p168 = scmp.ne.s32.totalorder %s163, %s165
      %p169 = scmp.eq.s32.totalorder %s24, 0
      %p170 = por %p168, %p169
      %p171 = scmp.ne.s32.totalorder %s163, %s165
      %p172 = scmp.eq.s32.totalorder %s29, 3
      %p173 = por %p171, %p172
      %p174 = scmp.ne.s32.totalorder %s165, %s166
      %p175 = scmp.eq.s32.totalorder %s29, 0
      %p176 = por %p174, %p175
      %p177 = scmp.ne.s32.totalorder %s165, %s166
      %p178 = scmp.eq.s32.totalorder %s30, 3
      %p179 = por %p177, %p178
      %p181 = scmp.ne.s32.totalorder %s166, %s180
      %p182 = scmp.eq.s32.totalorder %s30, 0
      %p183 = por %p181, %p182
      %s185 = sadd.s32 %s184, 1
      %p188 = scmp.eq.s32.totalorder %s24, 3
      %p189 = scmp.ne.s32.totalorder %s184, %s186
      %p190 = scmp.eq.s32.totalorder %s24, 0
      %p191 = por %p189, %p190
      %p192 = scmp.ne.s32.totalorder %s184, %s186
      %p193 = scmp.eq.s32.totalorder %s29, 3
      %p194 = por %p192, %p193
      %p195 = scmp.ne.s32.totalorder %s186, %s187
      %p196 = scmp.eq.s32.totalorder %s29, 0
      %p197 = por %p195, %p196
      %p198 = scmp.ne.s32.totalorder %s186, %s187
      %p199 = scmp.eq.s32.totalorder %s30, 3
      %p200 = por %p198, %p199
      %p202 = scmp.ne.s32.totalorder %s187, %s201
      %p203 = scmp.eq.s32.totalorder %s30, 0
      %p204 = por %p202, %p203
      %s206 = sadd.s32 %s205, 1
      %p209 = scmp.eq.s32.totalorder %s24, 3
      %p210 = scmp.ne.s32.totalorder %s205, %s207
      %p211 = scmp.eq.s32.totalorder %s24, 0
      %p212 = por %p210, %p211
      %p213 = scmp.ne.s32.totalorder %s205, %s207
      %p214 = scmp.eq.s32.totalorder %s29, 3
      %p215 = por %p213, %p214
      %p216 = scmp.ne.s32.totalorder %s207, %s208
      %p217 = scmp.eq.s32.totalorder %s29, 0
      %p218 = por %p216, %p217
      %p219 = scmp.ne.s32.totalorder %s207, %s208
      %p220 = scmp.eq.s32.totalorder %s30, 3
      %p221 = por %p219, %p220
      %p223 = scmp.ne.s32.totalorder %s208, %s222
      %p224 = scmp.eq.s32.totalorder %s30, 0
      %p225 = por %p223, %p224
      %s227 = sadd.s32 %s226, 1
      %p230 = scmp.eq.s32.totalorder %s24, 3
      %p231 = scmp.ne.s32.totalorder %s226, %s228
      %p232 = scmp.eq.s32.totalorder %s24, 0
      %p233 = por %p231, %p232
      %p234 = scmp.ne.s32.totalorder %s226, %s228
      %p235 = scmp.eq.s32.totalorder %s29, 3
      %p236 = por %p234, %p235
      %p237 = scmp.ne.s32.totalorder %s228, %s229
      %p238 = scmp.eq.s32.totalorder %s29, 0
      %p239 = por %p237, %p238
      %p240 = scmp.ne.s32.totalorder %s228, %s229
      %p241 = scmp.eq.s32.totalorder %s30, 3
      %p242 = por %p240, %p241
      %p244 = scmp.ne.s32.totalorder %s229, %s243
      %p245 = scmp.eq.s32.totalorder %s30, 0
      %p246 = por %p244, %p245
      %s248 = sadd.s32 %s247, 1
      %p251 = scmp.eq.s32.totalorder %s24, 3
      %p252 = scmp.ne.s32.totalorder %s247, %s249
      %p253 = scmp.eq.s32.totalorder %s24, 0
      %p254 = por %p252, %p253
      %p255 = scmp.ne.s32.totalorder %s247, %s249
      %p256 = scmp.eq.s32.totalorder %s29, 3
      %p257 = por %p255, %p256
      %p258 = scmp.ne.s32.totalorder %s249, %s250
      %p259 = scmp.eq.s32.totalorder %s29, 0
      %p260 = por %p258, %p259
      %p261 = scmp.ne.s32.totalorder %s249, %s250
      %p262 = scmp.eq.s32.totalorder %s30, 3
      %p263 = por %p261, %p262
      %p265 = scmp.ne.s32.totalorder %s250, %s264
      %p266 = scmp.eq.s32.totalorder %s30, 0
      %p267 = por %p265, %p266
      %s268 = ssub.s32 %s24, %s31
      %p269 = scmp.eq.s32.totalorder %s268, 0
      %s271 = sadd.s32 %s270, 1
      %s272 = scalar_select %p269, %s270, %s271
      %p275 = pneg %p269
      %p276 = scmp.eq.s32.totalorder %s24, 3
      %p277 = por %p275, %p276
      %p278 = scmp.ne.s32.totalorder %s270, %s273
      %p279 = scmp.eq.s32.totalorder %s24, 0
      %p280 = por %p278, %p279
      %p281 = scmp.ne.s32.totalorder %s270, %s273
      %p282 = scmp.eq.s32.totalorder %s29, 3
      %p283 = por %p281, %p282
      %p284 = scmp.ne.s32.totalorder %s273, %s274
      %p285 = scmp.eq.s32.totalorder %s29, 0
      %p286 = por %p284, %p285
      %p287 = scmp.ne.s32.totalorder %s273, %s274
      %p288 = scmp.eq.s32.totalorder %s30, 3
      %p289 = por %p287, %p288
      %p291 = scmp.ne.s32.totalorder %s274, %s290
      %p292 = scmp.eq.s32.totalorder %s30, 0
      %p293 = por %p291, %p292
      %s294 = ssub.s32 %s24, %s31
      %p295 = scmp.eq.s32.totalorder %s294, 0
      %s297 = sadd.s32 %s296, 1
      %s298 = scalar_select %p295, %s296, %s297
      %p301 = pneg %p295
      %p302 = scmp.eq.s32.totalorder %s24, 3
      %p303 = por %p301, %p302
      %p304 = scmp.ne.s32.totalorder %s296, %s299
      %p305 = scmp.eq.s32.totalorder %s24, 0
      %p306 = por %p304, %p305
      %p307 = scmp.ne.s32.totalorder %s296, %s299
      %p308 = scmp.eq.s32.totalorder %s29, 3
      %p309 = por %p307, %p308
      %p310 = scmp.ne.s32.totalorder %s299, %s300
      %p311 = scmp.eq.s32.totalorder %s29, 0
      %p312 = por %p310, %p311
      %p313 = scmp.ne.s32.totalorder %s299, %s300
      %p314 = scmp.eq.s32.totalorder %s30, 3
      %p315 = por %p313, %p314
      %p317 = scmp.ne.s32.totalorder %s300, %s316
      %p318 = scmp.eq.s32.totalorder %s30, 0
      %p319 = por %p317, %p318
      %s320 = ssub.s32 %s24, %s31
      %p321 = scmp.eq.s32.totalorder %s320, 0
      %s323 = sadd.s32 %s322, 1
      %s324 = scalar_select %p321, %s322, %s323
      %p327 = pneg %p321
      %p328 = scmp.eq.s32.totalorder %s24, 3
      %p329 = por %p327, %p328
      %p330 = scmp.ne.s32.totalorder %s322, %s325
      %p331 = scmp.eq.s32.totalorder %s24, 0
      %p332 = por %p330, %p331
      %p333 = scmp.ne.s32.totalorder %s322, %s325
      %p334 = scmp.eq.s32.totalorder %s29, 3
      %p335 = por %p333, %p334
      %p336 = scmp.ne.s32.totalorder %s325, %s326
      %p337 = scmp.eq.s32.totalorder %s29, 0
      %p338 = por %p336, %p337
      %p339 = scmp.ne.s32.totalorder %s325, %s326
      %p340 = scmp.eq.s32.totalorder %s30, 3
      %p341 = por %p339, %p340
      %p343 = scmp.ne.s32.totalorder %s326, %s342
      %p344 = scmp.eq.s32.totalorder %s30, 0
      %p345 = por %p343, %p344
      %p346 = scmp.le.s32.totalorder 1, %s24
      %p347 = scmp.lt.s32.totalorder %s24, 5
      %p348 = pnand %p346, %p347
      %p349 = pneg %p348
      // Predicated region
      $region9: #{tpu_custom_call.1} parent=5 // pred_check
        _
      $region10: #{tpu_custom_call.1} parent=5 // pred_check_branch
        %351 = sbr.rel (%p348) target = $region12
      $region11: #{tpu_custom_call.1} parent=5 // pred_region
        %s352 = ssub.s32 %s24, 1
        // Predicated region
        $region13: #{tpu_custom_call.1} parent=11 // pred_check
          %p353 = pneg %p71
        $region14: #{tpu_custom_call.1} parent=11 // pred_check_branch
          %355 = sbr.rel (%p353) target = $region16
        $region15: #{tpu_custom_call.1} parent=11 // pred_region
          _
        $region16: #{tpu_custom_call.1} parent=11 // pred_fallthru
          _
        // Predicated region
        $region17: #{tpu_custom_call.1} parent=11 // pred_check
          %p356 = pneg %p92
        $region18: #{tpu_custom_call.1} parent=11 // pred_check_branch
          %358 = sbr.rel (%p356) target = $region20
        $region19: #{tpu_custom_call.1} parent=11 // pred_region
          _
        $region20: #{tpu_custom_call.1} parent=11 // pred_fallthru
          _
        // Predicated region
        $region21: #{tpu_custom_call.1} parent=11 // pred_check
          %p359 = pneg %p113
        $region22: #{tpu_custom_call.1} parent=11 // pred_check_branch
          %361 = sbr.rel (%p359) target = $region24
        $region23: #{tpu_custom_call.1} parent=11 // pred_region
          _
        $region24: #{tpu_custom_call.1} parent=11 // pred_fallthru
          _
        // Predicated region
        $region25: #{tpu_custom_call.1} parent=11 // pred_check
          %p362 = pneg %p134
        $region26: #{tpu_custom_call.1} parent=11 // pred_check_branch
          %364 = sbr.rel (%p362) target = $region28
        $region27: #{tpu_custom_call.1} parent=11 // pred_region
          _
        $region28: #{tpu_custom_call.1} parent=11 // pred_fallthru
          _
        // Predicated region
        $region29: #{tpu_custom_call.1} parent=11 // pred_check
          %p365 = pneg %p155
        $region30: #{tpu_custom_call.1} parent=11 // pred_check_branch
          %367 = sbr.rel (%p365) target = $region32
        $region31: #{tpu_custom_call.1} parent=11 // pred_region
          _
        $region32: #{tpu_custom_call.1} parent=11 // pred_fallthru
          _
        // Predicated region
        $region33: #{tpu_custom_call.1} parent=11 // pred_check
          %p368 = pneg %p176
        $region34: #{tpu_custom_call.1} parent=11 // pred_check_branch
          %370 = sbr.rel (%p368) target = $region36
        $region35: #{tpu_custom_call.1} parent=11 // pred_region
          %s372 = ssub.s32 16, 16
          %373 = vsyncadd [#allocation3], %s372
          %s375 = sshll.u32 [#allocation2], 4
          %s376 = int_to_ptr.vmem [resolvable:$true] %s375
          %378 = dma.hbm_to_vmem [thread:$0]  %s6, 16, %s376, [#allocation3]
        $region36: #{tpu_custom_call.1} parent=11 // pred_fallthru
          _
        // Predicated region
        $region37: #{tpu_custom_call.1} parent=11 // pred_check
          %p379 = pneg %p197
        $region38: #{tpu_custom_call.1} parent=11 // pred_check_branch
          %381 = sbr.rel (%p379) target = $region40
        $region39: #{tpu_custom_call.1} parent=11 // pred_region
          _
        $region40: #{tpu_custom_call.1} parent=11 // pred_fallthru
          _
        // Predicated region
        $region41: #{tpu_custom_call.1} parent=11 // pred_check
          %p382 = pneg %p218
        $region42: #{tpu_custom_call.1} parent=11 // pred_check_branch
          %384 = sbr.rel (%p382) target = $region44
        $region43: #{tpu_custom_call.1} parent=11 // pred_region
          _
        $region44: #{tpu_custom_call.1} parent=11 // pred_fallthru
          _
        // Predicated region
        $region45: #{tpu_custom_call.1} parent=11 // pred_check
          %p385 = pneg %p239
        $region46: #{tpu_custom_call.1} parent=11 // pred_check_branch
          %387 = sbr.rel (%p385) target = $region48
        $region47: #{tpu_custom_call.1} parent=11 // pred_region
          _
        $region48: #{tpu_custom_call.1} parent=11 // pred_fallthru
          _
        // Predicated region
        $region49: #{tpu_custom_call.1} parent=11 // pred_check
          %p388 = pneg %p260
        $region50: #{tpu_custom_call.1} parent=11 // pred_check_branch
          %390 = sbr.rel (%p388) target = $region52
        $region51: #{tpu_custom_call.1} parent=11 // pred_region
          _
        $region52: #{tpu_custom_call.1} parent=11 // pred_fallthru
          _
      $region12: #{tpu_custom_call.1} parent=5 // pred_fallthru
        _
      %p391 = scmp.lt.s32.totalorder %s24, 4
      // Predicated region
      $region53: #{tpu_custom_call.1} parent=5 // pred_check
        %p392 = pneg %p391
      $region54: #{tpu_custom_call.1} parent=5 // pred_check_branch
        %394 = sbr.rel (%p392) target = $region56
      $region55: #{tpu_custom_call.1} parent=5 // pred_region
        // Predicated region
        $region57: #{tpu_custom_call.1} parent=55 // pred_check
          %p395 = pneg %p44
        $region58: #{tpu_custom_call.1} parent=55 // pred_check_branch
          %397 = sbr.rel (%p395) target = $region60
        $region59: #{tpu_custom_call.1} parent=55 // pred_region
          %p398 = scmp.lt.s32.totalorder %s24, 3
          %s399 = scalar_select %p398, %s24, 3
          %s400 = smul.addr %s399, 2
          %s401 = smul.addr %s400, 8
          %s402 = scalar_lea.vmem %s0, %s401
        $region60: #{tpu_custom_call.1} parent=55 // pred_fallthru
          _
      $region56: #{tpu_custom_call.1} parent=5 // pred_fallthru
        _
      %p403 = scmp.le.s32.totalorder 1, %s24
      %p404 = scmp.lt.s32.totalorder %s24, 5
      %p405 = pnand %p403, %p404
      %p406 = pneg %p405
      // Predicated region
      $region61: #{tpu_custom_call.1} parent=5 // pred_check
        _
      $region62: #{tpu_custom_call.1} parent=5 // pred_check_branch
        %408 = sbr.rel (%p405) target = $region64
      $region63: #{tpu_custom_call.1} parent=5 // pred_region
        %s409 = ssub.s32 %s24, 1
        // Predicated region
        $region65: #{tpu_custom_call.1} parent=63 // pred_check
          %p410 = pneg %p176
        $region66: #{tpu_custom_call.1} parent=63 // pred_check_branch
          %412 = sbr.rel (%p410) target = $region68
        $region67: #{tpu_custom_call.1} parent=63 // pred_region
          %413 = dma.done [#allocation3], 16
        $region68: #{tpu_custom_call.1} parent=63 // pred_fallthru
          _
        %p414 = scmp.lt.s32.totalorder %s29, 3
        %s415 = scalar_select %p414, %s29, 3
        %s416 = smul.addr %s415, 2
        %s417 = smul.addr %s416, 8
        %s418 = scalar_lea.vmem %s0, %s417
        %p419 = pneg %p50
        %p420 = pneg %p47
        %p421 = pneg %p71
        %p422 = pneg %p68
        %p423 = pneg %p92
        %p424 = pneg %p89
        %p425 = pneg %p113
        %p426 = pneg %p110
        %p427 = pneg %p134
        %p428 = pneg %p131
        %p429 = pneg %p155
        %p430 = pneg %p152
        %p431 = pneg %p176
        %p432 = pneg %p173
        %p433 = pneg %p197
        %p434 = pneg %p194
        %p435 = pneg %p218
        %p436 = pneg %p215
        %p437 = pneg %p239
        %p438 = pneg %p236
        %p439 = pneg %p260
        %p440 = pneg %p257
        %p441 = pneg %p286
        %p442 = pneg %p283
        %s443 = sand.u32 %s273, 1
        %s444 = scalar_lea.sflag [#allocation4], %s443
        %s445 = sand.u32 %s273, 1
        %s446 = smul.addr %s445, 8
        %s447 = scalar_lea.vmem [#allocation5], %s446
        %p448 = pneg %p312
        %p449 = pneg %p309
        %p450 = scmp.lt.s32.totalorder %s29, 3
        %s451 = scalar_select %p450, %s29, 3
        %s452 = smul.addr %s451, 8
        %s453 = scalar_lea.vmem %s12, %s452
        %p454 = pneg %p338
        %p455 = pneg %p335
        %p456 = scmp.lt.s32.totalorder %s29, 3
        %s457 = scalar_select %p456, %s29, 3
        %s458 = smul.addr %s457, 8
        %s459 = scalar_lea.vmem %s13, %s458
        %p460 = scmp.lt.s32.totalorder %s29, 3
        %s461 = scalar_select %p460, %s29, 3
        %s462 = smul.addr %s461, 2
        %s463 = smul.addr %s462, 8
        %s464 = scalar_lea.vmem %s0, %s463
        %p465 = scmp.lt.s32.totalorder %s29, 3
        %s466 = scalar_select %p465, %s29, 3
        %s467 = smul.addr %s466, 8
        %s468 = scalar_lea.vmem %s12, %s467
        %p469 = scmp.lt.s32.totalorder %s29, 3
        %s470 = scalar_select %p469, %s29, 3
        %s471 = smul.addr %s470, 8
        %s472 = scalar_lea.vmem %s13, %s471
        %v473 = vld [vmem:[%s464] sm:$0xff]
        %v474 = vld [vmem:[%s464 + $0x8] sm:$0xff]
        %v475 = vld [vmem:[%s1] sm:$0xff]
        %v476 = vld [vmem:[%s1 + $0x8] sm:$0xff]
        %v477 = vld [vmem:[%s1 + $0x10] sm:$0xff]
        %v478 = vld [vmem:[%s1 + $0x18] sm:$0xff]
        %v479 = vld [vmem:[%s2] sm:$0x1]
        %v481 = vlaneseq
        %v482 = vshrl.u32 %v481, 7
        %v483 = vsub.s32 0, %v482
        %v484 = vrot.slane %v479, %v483
        %vm486 = vcmask 261120
        %v488 = vsel %vm486, %v473, 0
        %490 = vmatprep.subr.mxu0 0.0
        %491 = vmatpush1.msra.mxu0 %v475
        %492 = vmatprep.subr.mxu0 0.0
        %493 = vmatpush1.msra.mxu0 %v476
        %494 = vmatprep.subr.mxu0 0.0
        %495 = vmatpush1.msra.mxu0 %v477
        %496 = vmatprep.subr.mxu0 0.0
        %497 = vmatpush1.msra.mxu0 %v478
        %498 = vmatprep.subr.mxu0 0.0
        %499 = vmatpush1.msra.mxu0 0.0
        %500 = vmatprep.subr.mxu0 0.0
        %501 = vmatpush1.msra.mxu0 0.0
        %502 = vmatprep.subr.mxu0 0.0
        %503 = vmatpush1.msra.mxu0 0.0
        %504 = vmatprep.subr.mxu0 0.0
        %505 = vmatpush1.msra.mxu0 0.0
        %506 = vmatprep.subr.mxu0 0.0
        %507 = vmatpush1.msra.mxu0 0.0
        %508 = vmatprep.subr.mxu0 0.0
        %509 = vmatpush1.msra.mxu0 0.0
        %510 = vmatprep.subr.mxu0 0.0
        %511 = vmatpush1.msra.mxu0 0.0
        %512 = vmatprep.subr.mxu0 0.0
        %513 = vmatpush1.msra.mxu0 0.0
        %514 = vmatprep.subr.mxu0 0.0
        %515 = vmatpush1.msra.mxu0 0.0
        %516 = vmatprep.subr.mxu0 0.0
        %517 = vmatpush1.msra.mxu0 0.0
        %518 = vmatprep.subr.mxu0 0.0
        %519 = vmatpush1.msra.mxu0 0.0
        %520 = vmatprep.subr.mxu0 0.0
        %521 = vmatpush1.msra.mxu0 0.0
        %522 = vmatprep.subr.mxu0 0.0
        %523 = vmatpush1.msra.mxu0 0.0
        %524 = vmatprep.subr.mxu0 0.0
        %525 = vmatpush1.msra.mxu0 0.0
        %526 = vmatprep.subr.mxu0 0.0
        %527 = vmatpush1.msra.mxu0 0.0
        %528 = vmatprep.subr.mxu0 0.0
        %529 = vmatpush1.msra.mxu0 0.0
        %530 = vmatprep.subr.mxu0 0.0
        %531 = vmatpush1.msra.mxu0 0.0
        %532 = vmatprep.subr.mxu0 0.0
        %533 = vmatpush1.msra.mxu0 0.0
        %534 = vmatprep.subr.mxu0 0.0
        %535 = vmatpush1.msra.mxu0 0.0
        %536 = vmatprep.subr.mxu0 0.0
        %537 = vmatpush1.msra.mxu0 0.0
        %538 = vmatprep.subr.mxu0 0.0
        %539 = vmatpush1.msra.mxu0 0.0
        %540 = vmatprep.subr.mxu0 0.0
        %541 = vmatpush1.msra.mxu0 0.0
        %542 = vmatprep.subr.mxu0 0.0
        %543 = vmatpush1.msra.mxu0 0.0
        %544 = vmatprep.subr.mxu0 0.0
        %545 = vmatpush1.msra.mxu0 0.0
        %546 = vmatprep.subr.mxu0 0.0
        %547 = vmatpush1.msra.mxu0 0.0
        %548 = vmatprep.subr.mxu0 0.0
        %549 = vmatpush1.msra.mxu0 0.0
        %550 = vmatprep.subr.mxu0 0.0
        %551 = vmatpush1.msra.mxu0 0.0
        %552 = vmatprep.subr.mxu0 0.0
        %553 = vmatpush1.msra.mxu0 0.0
        %554 = vmatprep.mubr.f32.mxu0 0.0
        %555 = vmatmul.mubr.f32.gmra.mrb[0].mxu0 %v488
        %v556 = vpop.f32.mrb[0].mxu0
        %v557 = vadd.f32 %v484, %v556
        %v558 = vpop.f32.mrb[0].mxu0
        %559 = vdwg.mxu0
        %vm560 = vcmask 64512
        %561 = vst.msk [vmem:[%s447] sm:$0xff] %vm560, %v557
        %v562 = vld [vmem:[%s3] sm:$0xff]
        %v563 = vld [vmem:[%s3 + $0x8] sm:$0xff]
        %v564 = vld [vmem:[%s3 + $0x10] sm:$0xff]
        %v565 = vld [vmem:[%s3 + $0x18] sm:$0xff]
        %v566 = vld [vmem:[%s4] sm:$0x1]
        %v568 = vlaneseq
        %v569 = vshrl.u32 %v568, 7
        %v570 = vsub.s32 0, %v569
        %v571 = vrot.slane %v566, %v570
        %573 = vmatprep.subr.mxu0 0.0
        %574 = vmatpush1.msra.mxu0 %v562
        %575 = vmatprep.subr.mxu0 0.0
        %576 = vmatpush1.msra.mxu0 %v563
        %577 = vmatprep.subr.mxu0 0.0
        %578 = vmatpush1.msra.mxu0 %v564
        %579 = vmatprep.subr.mxu0 0.0
        %580 = vmatpush1.msra.mxu0 %v565
        %581 = vmatprep.subr.mxu0 0.0
        %582 = vmatpush1.msra.mxu0 0.0
        %583 = vmatprep.subr.mxu0 0.0
        %584 = vmatpush1.msra.mxu0 0.0
        %585 = vmatprep.subr.mxu0 0.0
        %586 = vmatpush1.msra.mxu0 0.0
        %587 = vmatprep.subr.mxu0 0.0
        %588 = vmatpush1.msra.mxu0 0.0
        %589 = vmatprep.subr.mxu0 0.0
        %590 = vmatpush1.msra.mxu0 0.0
        %591 = vmatprep.subr.mxu0 0.0
        %592 = vmatpush1.msra.mxu0 0.0
        %593 = vmatprep.subr.mxu0 0.0
        %594 = vmatpush1.msra.mxu0 0.0
        %595 = vmatprep.subr.mxu0 0.0
        %596 = vmatpush1.msra.mxu0 0.0
        %597 = vmatprep.subr.mxu0 0.0
        %598 = vmatpush1.msra.mxu0 0.0
        %599 = vmatprep.subr.mxu0 0.0
        %600 = vmatpush1.msra.mxu0 0.0
        %601 = vmatprep.subr.mxu0 0.0
        %602 = vmatpush1.msra.mxu0 0.0
        %603 = vmatprep.subr.mxu0 0.0
        %604 = vmatpush1.msra.mxu0 0.0
        %605 = vmatprep.subr.mxu0 0.0
        %606 = vmatpush1.msra.mxu0 0.0
        %607 = vmatprep.subr.mxu0 0.0
        %608 = vmatpush1.msra.mxu0 0.0
        %609 = vmatprep.subr.mxu0 0.0
        %610 = vmatpush1.msra.mxu0 0.0
        %611 = vmatprep.subr.mxu0 0.0
        %612 = vmatpush1.msra.mxu0 0.0
        %613 = vmatprep.subr.mxu0 0.0
        %614 = vmatpush1.msra.mxu0 0.0
        %615 = vmatprep.subr.mxu0 0.0
        %616 = vmatpush1.msra.mxu0 0.0
        %617 = vmatprep.subr.mxu0 0.0
        %618 = vmatpush1.msra.mxu0 0.0
        %619 = vmatprep.subr.mxu0 0.0
        %620 = vmatpush1.msra.mxu0 0.0
        %621 = vmatprep.subr.mxu0 0.0
        %622 = vmatpush1.msra.mxu0 0.0
        %623 = vmatprep.subr.mxu0 0.0
        %624 = vmatpush1.msra.mxu0 0.0
        %625 = vmatprep.subr.mxu0 0.0
        %626 = vmatpush1.msra.mxu0 0.0
        %627 = vmatprep.subr.mxu0 0.0
        %628 = vmatpush1.msra.mxu0 0.0
        %629 = vmatprep.subr.mxu0 0.0
        %630 = vmatpush1.msra.mxu0 0.0
        %631 = vmatprep.subr.mxu0 0.0
        %632 = vmatpush1.msra.mxu0 0.0
        %633 = vmatprep.subr.mxu0 0.0
        %634 = vmatpush1.msra.mxu0 0.0
        %635 = vmatprep.subr.mxu0 0.0
        %636 = vmatpush1.msra.mxu0 0.0
        %637 = vmatprep.mubr.f32.mxu0 0.0
        %638 = vmatmul.mubr.f32.gmra.mrb[0].mxu0 %v488
        %v639 = vpop.f32.mrb[0].mxu0
        %v640 = vadd.f32 %v571, %v639
        %v641 = vpop.f32.mrb[0].mxu0
        %642 = vdwg.mxu0
        %v643 = vmax.f32 %v640, 0.0
        %v644 = vld [vmem:[%s5] sm:$0xff]
        %v645 = vld [vmem:[%s5 + $0x8] sm:$0xff]
        %v646 = vld [vmem:[%s5 + $0x10] sm:$0xff]
        %v647 = vld [vmem:[%s5 + $0x18] sm:$0xff]
        %v648 = vld [vmem:[#allocation2] sm:$0x1]
        %v650 = vlaneseq
        %v651 = vshrl.u32 %v650, 7
        %v652 = vsub.s32 0, %v651
        %v653 = vrot.slane %v648, %v652
        %v656 = vsel %vm486, %v643, 0
        %658 = vmatprep.subr.mxu0 0.0
        %659 = vmatpush1.msra.mxu0 %v644
        %660 = vmatprep.subr.mxu0 0.0
        %661 = vmatpush1.msra.mxu0 %v645
        %662 = vmatprep.subr.mxu0 0.0
        %663 = vmatpush1.msra.mxu0 %v646
        %664 = vmatprep.subr.mxu0 0.0
        %665 = vmatpush1.msra.mxu0 %v647
        %666 = vmatprep.subr.mxu0 0.0
        %667 = vmatpush1.msra.mxu0 0.0
        %668 = vmatprep.subr.mxu0 0.0
        %669 = vmatpush1.msra.mxu0 0.0
        %670 = vmatprep.subr.mxu0 0.0
        %671 = vmatpush1.msra.mxu0 0.0
        %672 = vmatprep.subr.mxu0 0.0
        %673 = vmatpush1.msra.mxu0 0.0
        %674 = vmatprep.subr.mxu0 0.0
        %675 = vmatpush1.msra.mxu0 0.0
        %676 = vmatprep.subr.mxu0 0.0
        %677 = vmatpush1.msra.mxu0 0.0
        %678 = vmatprep.subr.mxu0 0.0
        %679 = vmatpush1.msra.mxu0 0.0
        %680 = vmatprep.subr.mxu0 0.0
        %681 = vmatpush1.msra.mxu0 0.0
        %682 = vmatprep.subr.mxu0 0.0
        %683 = vmatpush1.msra.mxu0 0.0
        %684 = vmatprep.subr.mxu0 0.0
        %685 = vmatpush1.msra.mxu0 0.0
        %686 = vmatprep.subr.mxu0 0.0
        %687 = vmatpush1.msra.mxu0 0.0
        %688 = vmatprep.subr.mxu0 0.0
        %689 = vmatpush1.msra.mxu0 0.0
        %690 = vmatprep.subr.mxu0 0.0
        %691 = vmatpush1.msra.mxu0 0.0
        %692 = vmatprep.subr.mxu0 0.0
        %693 = vmatpush1.msra.mxu0 0.0
        %694 = vmatprep.subr.mxu0 0.0
        %695 = vmatpush1.msra.mxu0 0.0
        %696 = vmatprep.subr.mxu0 0.0
        %697 = vmatpush1.msra.mxu0 0.0
        %698 = vmatprep.subr.mxu0 0.0
        %699 = vmatpush1.msra.mxu0 0.0
        %700 = vmatprep.subr.mxu0 0.0
        %701 = vmatpush1.msra.mxu0 0.0
        %702 = vmatprep.subr.mxu0 0.0
        %703 = vmatpush1.msra.mxu0 0.0
        %704 = vmatprep.subr.mxu0 0.0
        %705 = vmatpush1.msra.mxu0 0.0
        %706 = vmatprep.subr.mxu0 0.0
        %707 = vmatpush1.msra.mxu0 0.0
        %708 = vmatprep.subr.mxu0 0.0
        %709 = vmatpush1.msra.mxu0 0.0
        %710 = vmatprep.subr.mxu0 0.0
        %711 = vmatpush1.msra.mxu0 0.0
        %712 = vmatprep.subr.mxu0 0.0
        %713 = vmatpush1.msra.mxu0 0.0
        %714 = vmatprep.subr.mxu0 0.0
        %715 = vmatpush1.msra.mxu0 0.0
        %716 = vmatprep.subr.mxu0 0.0
        %717 = vmatpush1.msra.mxu0 0.0
        %718 = vmatprep.subr.mxu0 0.0
        %719 = vmatpush1.msra.mxu0 0.0
        %720 = vmatprep.subr.mxu0 0.0
        %721 = vmatpush1.msra.mxu0 0.0
        %722 = vmatprep.mubr.f32.mxu0 0.0
        %723 = vmatmul.mubr.f32.gmra.mrb[0].mxu0 %v656
        %v724 = vpop.f32.mrb[0].mxu0
        %v725 = vadd.f32 %v653, %v724
        %v726 = vpop.f32.mrb[0].mxu0
        %727 = vdwg.mxu0
        %v728 = vmax.f32 %v725, 0.0
        %v729 = vld [vmem:[%s7] sm:$0xff]
        %v730 = vld [vmem:[%s7 + $0x8] sm:$0xff]
        %v731 = vld [vmem:[%s7 + $0x10] sm:$0xff]
        %v732 = vld [vmem:[%s7 + $0x18] sm:$0xff]
        %v733 = vld [vmem:[%s8] sm:$0x1]
        %v735 = vlaneseq
        %v736 = vshrl.u32 %v735, 7
        %v737 = vsub.s32 0, %v736
        %v738 = vrot.slane %v733, %v737
        %v741 = vsel %vm486, %v728, 0
        %743 = vmatprep.subr.mxu0 0.0
        %744 = vmatpush1.msra.mxu0 %v729
        %745 = vmatprep.subr.mxu0 0.0
        %746 = vmatpush1.msra.mxu0 %v730
        %747 = vmatprep.subr.mxu0 0.0
        %748 = vmatpush1.msra.mxu0 %v731
        %749 = vmatprep.subr.mxu0 0.0
        %750 = vmatpush1.msra.mxu0 %v732
        %751 = vmatprep.subr.mxu0 0.0
        %752 = vmatpush1.msra.mxu0 0.0
        %753 = vmatprep.subr.mxu0 0.0
        %754 = vmatpush1.msra.mxu0 0.0
        %755 = vmatprep.subr.mxu0 0.0
        %756 = vmatpush1.msra.mxu0 0.0
        %757 = vmatprep.subr.mxu0 0.0
        %758 = vmatpush1.msra.mxu0 0.0
        %759 = vmatprep.subr.mxu0 0.0
        %760 = vmatpush1.msra.mxu0 0.0
        %761 = vmatprep.subr.mxu0 0.0
        %762 = vmatpush1.msra.mxu0 0.0
        %763 = vmatprep.subr.mxu0 0.0
        %764 = vmatpush1.msra.mxu0 0.0
        %765 = vmatprep.subr.mxu0 0.0
        %766 = vmatpush1.msra.mxu0 0.0
        %767 = vmatprep.subr.mxu0 0.0
        %768 = vmatpush1.msra.mxu0 0.0
        %769 = vmatprep.subr.mxu0 0.0
        %770 = vmatpush1.msra.mxu0 0.0
        %771 = vmatprep.subr.mxu0 0.0
        %772 = vmatpush1.msra.mxu0 0.0
        %773 = vmatprep.subr.mxu0 0.0
        %774 = vmatpush1.msra.mxu0 0.0
        %775 = vmatprep.subr.mxu0 0.0
        %776 = vmatpush1.msra.mxu0 0.0
        %777 = vmatprep.subr.mxu0 0.0
        %778 = vmatpush1.msra.mxu0 0.0
        %779 = vmatprep.subr.mxu0 0.0
        %780 = vmatpush1.msra.mxu0 0.0
        %781 = vmatprep.subr.mxu0 0.0
        %782 = vmatpush1.msra.mxu0 0.0
        %783 = vmatprep.subr.mxu0 0.0
        %784 = vmatpush1.msra.mxu0 0.0
        %785 = vmatprep.subr.mxu0 0.0
        %786 = vmatpush1.msra.mxu0 0.0
        %787 = vmatprep.subr.mxu0 0.0
        %788 = vmatpush1.msra.mxu0 0.0
        %789 = vmatprep.subr.mxu0 0.0
        %790 = vmatpush1.msra.mxu0 0.0
        %791 = vmatprep.subr.mxu0 0.0
        %792 = vmatpush1.msra.mxu0 0.0
        %793 = vmatprep.subr.mxu0 0.0
        %794 = vmatpush1.msra.mxu0 0.0
        %795 = vmatprep.subr.mxu0 0.0
        %796 = vmatpush1.msra.mxu0 0.0
        %797 = vmatprep.subr.mxu0 0.0
        %798 = vmatpush1.msra.mxu0 0.0
        %799 = vmatprep.subr.mxu0 0.0
        %800 = vmatpush1.msra.mxu0 0.0
        %801 = vmatprep.subr.mxu0 0.0
        %802 = vmatpush1.msra.mxu0 0.0
        %803 = vmatprep.subr.mxu0 0.0
        %804 = vmatpush1.msra.mxu0 0.0
        %805 = vmatprep.subr.mxu0 0.0
        %806 = vmatpush1.msra.mxu0 0.0
        %807 = vmatprep.mubr.f32.mxu0 0.0
        %808 = vmatmul.mubr.f32.gmra.mrb[0].mxu0 %v741
        %v809 = vpop.f32.mrb[0].mxu0
        %v810 = vadd.f32 %v738, %v809
        %v811 = vpop.f32.mrb[0].mxu0
        %812 = vdwg.mxu0
        %v813 = vxor.u32 %v810, 2147483648
        %v814 = vmul.f32 %v813, 1.442695
        %v815 = vpow.pop %v814
        %v816 = vadd.f32 %v815, 1.0
        %v817 = vrcp.pop %v816
        %v818 = vmul.f32 1.0, %v817
        %vm819 = vcmask 31744
        %820 = vst.msk [vmem:[%s468] sm:$0xff] %vm819, %v818
        %v821 = vld [vmem:[%s9] sm:$0xff]
        %v822 = vld [vmem:[%s9 + $0x8] sm:$0xff]
        %v823 = vld [vmem:[%s9 + $0x10] sm:$0xff]
        %v824 = vld [vmem:[%s9 + $0x18] sm:$0xff]
        %v825 = vld [vmem:[%s10] sm:$0x1]
        %v827 = vlaneseq
        %v828 = vshrl.u32 %v827, 7
        %v829 = vsub.s32 0, %v828
        %v830 = vrot.slane %v825, %v829
        %v833 = vsel %vm486, %v474, 0
        %835 = vmatprep.subr.mxu0 0.0
        %836 = vmatpush1.msra.mxu0 %v821
        %837 = vmatprep.subr.mxu0 0.0
        %838 = vmatpush1.msra.mxu0 %v822
        %839 = vmatprep.subr.mxu0 0.0
        %840 = vmatpush1.msra.mxu0 %v823
        %841 = vmatprep.subr.mxu0 0.0
        %842 = vmatpush1.msra.mxu0 %v824
        %843 = vmatprep.subr.mxu0 0.0
        %844 = vmatpush1.msra.mxu0 0.0
        %845 = vmatprep.subr.mxu0 0.0
        %846 = vmatpush1.msra.mxu0 0.0
        %847 = vmatprep.subr.mxu0 0.0
        %848 = vmatpush1.msra.mxu0 0.0
        %849 = vmatprep.subr.mxu0 0.0
        %850 = vmatpush1.msra.mxu0 0.0
        %851 = vmatprep.subr.mxu0 0.0
        %852 = vmatpush1.msra.mxu0 0.0
        %853 = vmatprep.subr.mxu0 0.0
        %854 = vmatpush1.msra.mxu0 0.0
        %855 = vmatprep.subr.mxu0 0.0
        %856 = vmatpush1.msra.mxu0 0.0
        %857 = vmatprep.subr.mxu0 0.0
        %858 = vmatpush1.msra.mxu0 0.0
        %859 = vmatprep.subr.mxu0 0.0
        %860 = vmatpush1.msra.mxu0 0.0
        %861 = vmatprep.subr.mxu0 0.0
        %862 = vmatpush1.msra.mxu0 0.0
        %863 = vmatprep.subr.mxu0 0.0
        %864 = vmatpush1.msra.mxu0 0.0
        %865 = vmatprep.subr.mxu0 0.0
        %866 = vmatpush1.msra.mxu0 0.0
        %867 = vmatprep.subr.mxu0 0.0
        %868 = vmatpush1.msra.mxu0 0.0
        %869 = vmatprep.subr.mxu0 0.0
        %870 = vmatpush1.msra.mxu0 0.0
        %871 = vmatprep.subr.mxu0 0.0
        %872 = vmatpush1.msra.mxu0 0.0
        %873 = vmatprep.subr.mxu0 0.0
        %874 = vmatpush1.msra.mxu0 0.0
        %875 = vmatprep.subr.mxu0 0.0
        %876 = vmatpush1.msra.mxu0 0.0
        %877 = vmatprep.subr.mxu0 0.0
        %878 = vmatpush1.msra.mxu0 0.0
        %879 = vmatprep.subr.mxu0 0.0
        %880 = vmatpush1.msra.mxu0 0.0
        %881 = vmatprep.subr.mxu0 0.0
        %882 = vmatpush1.msra.mxu0 0.0
        %883 = vmatprep.subr.mxu0 0.0
        %884 = vmatpush1.msra.mxu0 0.0
        %885 = vmatprep.subr.mxu0 0.0
        %886 = vmatpush1.msra.mxu0 0.0
        %887 = vmatprep.subr.mxu0 0.0
        %888 = vmatpush1.msra.mxu0 0.0
        %889 = vmatprep.subr.mxu0 0.0
        %890 = vmatpush1.msra.mxu0 0.0
        %891 = vmatprep.subr.mxu0 0.0
        %892 = vmatpush1.msra.mxu0 0.0
        %893 = vmatprep.subr.mxu0 0.0
        %894 = vmatpush1.msra.mxu0 0.0
        %895 = vmatprep.subr.mxu0 0.0
        %896 = vmatpush1.msra.mxu0 0.0
        %897 = vmatprep.subr.mxu0 0.0
        %898 = vmatpush1.msra.mxu0 0.0
        %899 = vmatprep.mubr.f32.mxu0 0.0
        %900 = vmatmul.mubr.f32.gmra.mrb[0].mxu0 %v833
        %v901 = vpop.f32.mrb[0].mxu0
        %v902 = vadd.f32 %v830, %v901
        %v903 = vpop.f32.mrb[0].mxu0
        %904 = vdwg.mxu0
        %vm905 = vcmask 48128
        %906 = vst.msk [vmem:[%s472] sm:$0xff] %vm905, %v902
        %s907 = sand.u32 %s273, 1
        %s908 = scalar_lea.sflag [#allocation4], %s907
        %s909 = sand.u32 %s273, 1
        %s910 = smul.addr %s909, 8
        %s911 = scalar_lea.vmem [#allocation5], %s910
        %p912 = scmp.lt.s32.totalorder %s29, 3
        %s913 = scalar_select %p912, %s29, 3
        %s914 = smul.addr %s913, 8
        %s915 = scalar_lea.vmem %s12, %s914
        %p916 = scmp.lt.s32.totalorder %s29, 3
        %s917 = scalar_select %p916, %s29, 3
        %s918 = smul.addr %s917, 8
        %s919 = scalar_lea.vmem %s13, %s918
        // Predicated region
        $region69: #{tpu_custom_call.1} parent=63 // pred_check
          %p920 = pneg %p283
        $region70: #{tpu_custom_call.1} parent=63 // pred_check_branch
          %922 = sbr.rel (%p920) target = $region72
        $region71: #{tpu_custom_call.1} parent=63 // pred_region
          %s924 = ssub.s32 128, 128
          %925 = vsyncadd %s908, %s924
          %s926 = smul.addr %s29, 128
          %s927 = scalar_lea.hbm %s11, %s926
          %s929 = sshll.u32 %s911, 4
          %s930 = int_to_ptr.vmem [resolvable:$true] %s929
          %932 = dma.vmem_to_hbm [thread:$0]  %s930, 128, %s927, %s908
        $region72: #{tpu_custom_call.1} parent=63 // pred_fallthru
          _
        // Predicated region
        $region73: #{tpu_custom_call.1} parent=63 // pred_check
          %p933 = pneg %p309
        $region74: #{tpu_custom_call.1} parent=63 // pred_check_branch
          %935 = sbr.rel (%p933) target = $region76
        $region75: #{tpu_custom_call.1} parent=63 // pred_region
          _
        $region76: #{tpu_custom_call.1} parent=63 // pred_fallthru
          _
        // Predicated region
        $region77: #{tpu_custom_call.1} parent=63 // pred_check
          %p936 = pneg %p335
        $region78: #{tpu_custom_call.1} parent=63 // pred_check_branch
          %938 = sbr.rel (%p936) target = $region80
        $region79: #{tpu_custom_call.1} parent=63 // pred_region
          _
        $region80: #{tpu_custom_call.1} parent=63 // pred_fallthru
          _
      $region64: #{tpu_custom_call.1} parent=5 // pred_fallthru
        _
      %p939 = scmp.le.s32.totalorder 2, %s24
      // Predicated region
      $region81: #{tpu_custom_call.1} parent=5 // pred_check
        %p940 = pneg %p939
      $region82: #{tpu_custom_call.1} parent=5 // pred_check_branch
        %942 = sbr.rel (%p940) target = $region84
      $region83: #{tpu_custom_call.1} parent=5 // pred_region
        %s943 = ssub.s32 %s24, 2
        // Predicated region
        $region85: #{tpu_custom_call.1} parent=83 // pred_check
          %p944 = pneg %p289
        $region86: #{tpu_custom_call.1} parent=83 // pred_check_branch
          %946 = sbr.rel (%p944) target = $region88
        $region87: #{tpu_custom_call.1} parent=83 // pred_region
          %s947 = sand.u32 %s274, 1
          %s948 = scalar_lea.sflag [#allocation4], %s947
          %s949 = sand.u32 %s274, 1
          %s950 = smul.addr %s949, 8
          %s951 = scalar_lea.vmem [#allocation5], %s950
          %952 = dma.done %s948, 128
        $region88: #{tpu_custom_call.1} parent=83 // pred_fallthru
          _
        // Predicated region
        $region89: #{tpu_custom_call.1} parent=83 // pred_check
          %p953 = pneg %p315
        $region90: #{tpu_custom_call.1} parent=83 // pred_check_branch
          %955 = sbr.rel (%p953) target = $region92
        $region91: #{tpu_custom_call.1} parent=83 // pred_region
          %p956 = scmp.lt.s32.totalorder %s30, 3
          %s957 = scalar_select %p956, %s30, 3
          %s958 = smul.addr %s957, 8
          %s959 = scalar_lea.vmem %s12, %s958
        $region92: #{tpu_custom_call.1} parent=83 // pred_fallthru
          _
        // Predicated region
        $region93: #{tpu_custom_call.1} parent=83 // pred_check
          %p960 = pneg %p341
        $region94: #{tpu_custom_call.1} parent=83 // pred_check_branch
          %962 = sbr.rel (%p960) target = $region96
        $region95: #{tpu_custom_call.1} parent=83 // pred_region
          %p963 = scmp.lt.s32.totalorder %s30, 3
          %s964 = scalar_select %p963, %s30, 3
          %s965 = smul.addr %s964, 8
          %s966 = scalar_lea.vmem %s13, %s965
        $region96: #{tpu_custom_call.1} parent=83 // pred_fallthru
          _
      $region84: #{tpu_custom_call.1} parent=5 // pred_fallthru
        _
    $region6: #{tpu_custom_call.1} parent=1 // loop_footer
      %s28 = sadd.s32 1, %s24
    $region7: #{tpu_custom_call.1} parent=1 // loop_footer_branch
      %23 = sbr.rel target = $region3
    $region8: #{tpu_custom_call.1} parent=1 // loop_exit
      _
    %967 = vsyncpa [#allocation3], 1
    %s968 = scalar_lea.sflag [#allocation3], 1
    %969 = vsyncpa %s968, 1
    %970 = vsyncpa [#allocation4], 1
    %s971 = scalar_lea.sflag [#allocation4], 1
    %972 = vsyncpa %s971, 1

</llo_original>
